<compile_context>
chip_gen: v7x
topology: tpu7x:2x2x1
jax: 0.10.0
libtpu: 0.0.40
codegen_flags: <defaults>
</compile_context>

<pallas_src>
import jax
import jax.numpy as jnp
from jax import lax
from jax.experimental import pallas as pl
from jax.experimental.pallas import tpu as pltpu

# ----- small model dims consistent with the module's forward -----
B = 2            # batch
N_STIM = 3       # stimuli per example
NB = B * N_STIM  # stimuli folded into the batch dimension
STIM_DIM = 16    # raw stimulus feature dim
VOCAB = 20       # vocabulary size
EMB = 32         # token embedding dim
HID = 32         # LSTM hidden dim == grounding feature dim
SEQ = 8          # token sequence length
G4 = 4 * HID     # 128 -> exactly one lane width for the fused gates


def listener_kernel(tok_ref, stim_ref,
                    w1_ref, b1_ref, w2_ref, b2_ref,
                    wih_ref, whh_ref, blstm_ref,
                    wcls_ref, bcls_ref,
                    out_ref, xg_ref):
    # tok_ref : (SEQ, NB, EMB)  time-major embeddings, rows replicated per stimulus
    # stim_ref: (NB, STIM_DIM)  row = b * N_STIM + i
    # out_ref : (B, N_STIM)
    # xg_ref  : VMEM scratch (SEQ, NB, 4*HID) — hoisted input projection (+ LSTM bias)
    w1, b1 = w1_ref[...], b1_ref[...]
    w2, b2 = w2_ref[...], b2_ref[...]
    whh = whh_ref[...]
    wcls = wcls_ref[...]          # (1, HID)
    bcls = bcls_ref[...]          # (1, 1)

    # ---- hoisted LSTM input projection: ONE matmul for all timesteps & stimuli ----
    tok_flat = tok_ref[...].reshape(SEQ * NB, EMB)                       # (48, 32)
    xg = jnp.dot(tok_flat, wih_ref[...],
                 preferred_element_type=jnp.float32) + blstm_ref[...]    # (48, 128)
    xg_ref[...] = xg.reshape(SEQ, NB, G4)

    # ---- stimulus_encoder MLP, all stimuli at once (N_STIM folded into rows) ----
    stim = stim_ref[...]                                                 # (NB, STIM_DIM)
    hid = jnp.maximum(
        jnp.dot(stim, w1, preferred_element_type=jnp.float32) + b1, 0.0)
    h0 = jnp.dot(hid, w2, preferred_element_type=jnp.float32) + b2       # (NB, HID)
    c0 = jnp.zeros((NB, HID), jnp.float32)

    # ---- LSTM recurrence, batched over B*N_STIM rows; h0 = grounding feature ----
    def step(t, carry):
        h, c = carry
        gates = xg_ref[t] + jnp.dot(h, whh,
                                    preferred_element_type=jnp.float32)  # (NB, 4H)
        sig = jax.nn.sigmoid(gates)               # one full-width EUP pass (i,f,g,o)
        g_g = jnp.tanh(gates[:, 2 * HID:3 * HID])  # only the g slice uses tanh
        i_g = sig[:, 0 * HID:1 * HID]
        f_g = sig[:, 1 * HID:2 * HID]
        o_g = sig[:, 3 * HID:4 * HID]
        c = f_g * c + i_g * g_g
        h = o_g * jnp.tanh(c)
        return h, c

    h, _ = lax.fori_loop(0, SEQ, step, (h0, c0), unroll=True)

    # ---- classifier_head (Linear HID -> 1) for all stimuli + single dense store ----
    h3 = h.reshape(B, N_STIM, HID)                       # row b*N_STIM+i -> [b, i]
    out_ref[...] = jnp.sum(h3 * wcls, axis=-1) + bcls    # (B, N_STIM)


def context_free_listener(tok_rep, stim_flat, params):
    n_in = 2 + len(params)
    return pl.pallas_call(
        listener_kernel,
        out_shape=jax.ShapeDtypeStruct((B, N_STIM), jnp.float32),
        in_specs=[pl.BlockSpec(memory_space=pltpu.MemorySpace.VMEM)] * n_in,
        out_specs=pl.BlockSpec(memory_space=pltpu.MemorySpace.VMEM),
        scratch_shapes=[pltpu.VMEM((SEQ, NB, G4), jnp.float32)],
    )(tok_rep, stim_flat, *params)


def init_params(key):
    """Deterministic parameter init (PyTorch-style uniform(-1/sqrt(fan_in), .))."""
    ks = jax.random.split(key, 12)

    def u(k, shape, fan_in):
        lim = 1.0 / jnp.sqrt(jnp.float32(fan_in))
        return jax.random.uniform(k, shape, jnp.float32, -lim, lim)

    w1 = u(ks[0], (STIM_DIM, HID), STIM_DIM)
    b1 = u(ks[1], (1, HID), STIM_DIM)
    w2 = u(ks[2], (HID, HID), HID)
    b2 = u(ks[3], (1, HID), HID)
    wih = u(ks[4], (EMB, 4 * HID), HID)          # LSTM input->gates  (W_ih^T)
    whh = u(ks[5], (HID, 4 * HID), HID)          # LSTM hidden->gates (W_hh^T)
    blstm = u(ks[6], (1, 4 * HID), HID) + u(ks[7], (1, 4 * HID), HID)  # b_ih + b_hh
    wcls = u(ks[8], (1, HID), HID)               # classifier weight as row vector
    bcls = u(ks[9], (1, 1), HID)
    emb_table = jax.random.normal(ks[10], (VOCAB, EMB), jnp.float32) * 0.1
    return (w1, b1, w2, b2, wih, whh, blstm, wcls, bcls), emb_table


def reference(tok_emb, stimuli, params):
    """Pure-JAX reference that mirrors the PyTorch module's per-stimulus loop."""
    w1, b1, w2, b2, wih, whh, blstm, wcls, bcls = params
    outs = []
    for i in range(N_STIM):
        stim_i = stimuli[:, i]                               # (B, STIM_DIM)
        hid = jnp.maximum(stim_i @ w1 + b1, 0.0)
        h = hid @ w2 + b2                                    # grounding feature -> h0
        c = jnp.zeros((B, HID), jnp.float32)
        for t in range(SEQ):
            x_t = tok_emb[:, t]                              # (B, EMB)
            gates = x_t @ wih + h @ whh + blstm
            i_g = jax.nn.sigmoid(gates[:, :HID])
            f_g = jax.nn.sigmoid(gates[:, HID:2 * HID])
            g_g = jnp.tanh(gates[:, 2 * HID:3 * HID])
            o_g = jax.nn.sigmoid(gates[:, 3 * HID:])
            c = f_g * c + i_g * g_g
            h = o_g * jnp.tanh(c)
        outs.append(h @ wcls.T + bcls)                       # (B, 1)
    return jnp.concatenate(outs, axis=1)                     # (B, N_STIM)


if __name__ == "__main__":
    key = jax.random.PRNGKey(0)
    k_tok, k_stim, k_par = jax.random.split(key, 3)

    params, emb_table = init_params(k_par)

    # module-facing inputs: tokens (B, SEQ) int32 ids, stimuli (B, N_STIM, STIM_DIM)
    tokens = jax.random.randint(k_tok, (B, SEQ), 0, VOCAB, dtype=jnp.int32)
    stimuli = jax.random.normal(k_stim, (B, N_STIM, STIM_DIM), jnp.float32)

    # glue: embedding lookup + layout plumbing (documented in the header)
    tok_emb = emb_table[tokens]                              # (B, SEQ, EMB)
    tok_tmajor = jnp.transpose(tok_emb, (1, 0, 2))           # (SEQ, B, EMB)
    tok_rep = jnp.repeat(tok_tmajor, N_STIM, axis=1)         # (SEQ, NB, EMB), row = b*N_STIM+i
    stim_flat = stimuli.reshape(NB, STIM_DIM)                # (NB, STIM_DIM), row = b*N_STIM+i

    logits = context_free_listener(tok_rep, stim_flat, params)
    logits = jax.block_until_ready(logits)

    ref = reference(tok_emb, stimuli, params)
    assert logits.shape == (B, N_STIM)
    assert jnp.allclose(logits, ref, atol=2e-3, rtol=2e-3)

    print("KERNEL_OK")
</pallas_src>

<mosaic_0001>
module attributes {stable_mosaic.version = 11 : i64} {
  func.func @listener_kernel(%arg0: memref<8x6x32xf32, #tpu.memory_space<vmem>>, %arg1: memref<6x16xf32, #tpu.memory_space<vmem>>, %arg2: memref<16x32xf32, #tpu.memory_space<vmem>>, %arg3: memref<1x32xf32, #tpu.memory_space<vmem>>, %arg4: memref<32x32xf32, #tpu.memory_space<vmem>>, %arg5: memref<1x32xf32, #tpu.memory_space<vmem>>, %arg6: memref<32x128xf32, #tpu.memory_space<vmem>>, %arg7: memref<32x128xf32, #tpu.memory_space<vmem>>, %arg8: memref<1x128xf32, #tpu.memory_space<vmem>>, %arg9: memref<1x32xf32, #tpu.memory_space<vmem>>, %arg10: memref<1x1xf32, #tpu.memory_space<vmem>>, %arg11: memref<2x3xf32, #tpu.memory_space<vmem>>, %arg12: memref<8x6x128xf32, #tpu.memory_space<vmem>>) attributes {dimension_semantics = [], scalar_prefetch = 0 : i64, scratch_operands = 1 : i64, tpu.core_type = #tpu.core_type<tc>} {
    %c0 = arith.constant 0 : index
    %c0_0 = arith.constant 0 : index
    %0 = vector.load %arg2[%c0, %c0_0] : memref<16x32xf32, #tpu.memory_space<vmem>>, vector<16x32xf32>
    %c0_1 = arith.constant 0 : index
    %c0_2 = arith.constant 0 : index
    %1 = vector.load %arg3[%c0_1, %c0_2] : memref<1x32xf32, #tpu.memory_space<vmem>>, vector<1x32xf32>
    %c0_3 = arith.constant 0 : index
    %c0_4 = arith.constant 0 : index
    %2 = vector.load %arg4[%c0_3, %c0_4] : memref<32x32xf32, #tpu.memory_space<vmem>>, vector<32x32xf32>
    %c0_5 = arith.constant 0 : index
    %c0_6 = arith.constant 0 : index
    %3 = vector.load %arg5[%c0_5, %c0_6] : memref<1x32xf32, #tpu.memory_space<vmem>>, vector<1x32xf32>
    %c0_7 = arith.constant 0 : index
    %c0_8 = arith.constant 0 : index
    %4 = vector.load %arg7[%c0_7, %c0_8] : memref<32x128xf32, #tpu.memory_space<vmem>>, vector<32x128xf32>
    %c0_9 = arith.constant 0 : index
    %c0_10 = arith.constant 0 : index
    %5 = vector.load %arg9[%c0_9, %c0_10] : memref<1x32xf32, #tpu.memory_space<vmem>>, vector<1x32xf32>
    %c0_11 = arith.constant 0 : index
    %c0_12 = arith.constant 0 : index
    %6 = vector.load %arg10[%c0_11, %c0_12] : memref<1x1xf32, #tpu.memory_space<vmem>>, vector<1x1xf32>
    %c0_13 = arith.constant 0 : index
    %c0_14 = arith.constant 0 : index
    %c0_15 = arith.constant 0 : index
    %7 = vector.load %arg0[%c0_13, %c0_14, %c0_15] : memref<8x6x32xf32, #tpu.memory_space<vmem>>, vector<8x6x32xf32>
    %8 = vector.shape_cast %7 : vector<8x6x32xf32> to vector<48x32xf32>
    %c0_16 = arith.constant 0 : index
    %c0_17 = arith.constant 0 : index
    %9 = vector.load %arg6[%c0_16, %c0_17] : memref<32x128xf32, #tpu.memory_space<vmem>>, vector<32x128xf32>
    %cst = arith.constant dense<0.000000e+00> : vector<48x128xf32>
    %10 = tpu.matmul %8, %9, %cst {dimension_numbers = #tpu.dot_dimension_numbers<[1], [0], [0], [1], [0, 0, 1, 1], [], []>} : vector<48x32xf32>, vector<32x128xf32>, vector<48x128xf32> -> vector<48x128xf32>
    %c0_18 = arith.constant 0 : index
    %c0_19 = arith.constant 0 : index
    %11 = vector.load %arg8[%c0_18, %c0_19] : memref<1x128xf32, #tpu.memory_space<vmem>>, vector<1x128xf32>
    %12 = vector.broadcast %11 : vector<1x128xf32> to vector<48x128xf32>
    %13 = arith.addf %10, %12 : vector<48x128xf32>
    %14 = vector.shape_cast %13 : vector<48x128xf32> to vector<8x6x128xf32>
    %c0_20 = arith.constant 0 : index
    %c0_21 = arith.constant 0 : index
    %c0_22 = arith.constant 0 : index
    %15 = vector.load %arg12[%c0_20, %c0_21, %c0_22] : memref<8x6x128xf32, #tpu.memory_space<vmem>>, vector<8x6x128xf32>
    tpu.vector_store %arg12[%c0_20, %c0_21, %c0_22], %14 {strides = array<i32>} : memref<8x6x128xf32, #tpu.memory_space<vmem>>, vector<8x6x128xf32>,
    %c0_23 = arith.constant 0 : index
    %c0_24 = arith.constant 0 : index
    %16 = vector.load %arg1[%c0_23, %c0_24] : memref<6x16xf32, #tpu.memory_space<vmem>>, vector<6x16xf32>
    %cst_25 = arith.constant dense<0.000000e+00> : vector<6x32xf32>
    %17 = tpu.matmul %16, %0, %cst_25 {dimension_numbers = #tpu.dot_dimension_numbers<[1], [0], [0], [1], [0, 0, 1, 1], [], []>} : vector<6x16xf32>, vector<16x32xf32>, vector<6x32xf32> -> vector<6x32xf32>
    %18 = vector.broadcast %1 : vector<1x32xf32> to vector<6x32xf32>
    %19 = arith.addf %17, %18 : vector<6x32xf32>
    %cst_26 = arith.constant 0.000000e+00 : f32
    %20 = vector.broadcast %cst_26 : f32 to vector<6x32xf32>
    %21 = arith.maximumf %19, %20 : vector<6x32xf32>
    %cst_27 = arith.constant dense<0.000000e+00> : vector<6x32xf32>
    %22 = tpu.matmul %21, %2, %cst_27 {dimension_numbers = #tpu.dot_dimension_numbers<[1], [0], [0], [1], [0, 0, 1, 1], [], []>} : vector<6x32xf32>, vector<32x32xf32>, vector<6x32xf32> -> vector<6x32xf32>
    %23 = vector.broadcast %3 : vector<1x32xf32> to vector<6x32xf32>
    %24 = arith.addf %22, %23 : vector<6x32xf32>
    %cst_28 = arith.constant 0.000000e+00 : f32
    %25 = vector.broadcast %cst_28 : f32 to vector<6x32xf32>
    %c0_i32 = arith.constant 0 : i32
    %26 = arith.index_cast %c0_i32 : i32 to index
    %c0_29 = arith.constant 0 : index
    %c0_30 = arith.constant 0 : index
    %27 = vector.load %arg12[%26, %c0_29, %c0_30] : memref<8x6x128xf32, #tpu.memory_space<vmem>>, vector<1x6x128xf32>
    %28 = vector.shape_cast %27 : vector<1x6x128xf32> to vector<6x128xf32>
    %cst_31 = arith.constant dense<0.000000e+00> : vector<6x128xf32>
    %29 = tpu.matmul %24, %4, %cst_31 {dimension_numbers = #tpu.dot_dimension_numbers<[1], [0], [0], [1], [0, 0, 1, 1], [], []>} : vector<6x32xf32>, vector<32x128xf32>, vector<6x128xf32> -> vector<6x128xf32>
    %30 = arith.addf %28, %29 : vector<6x128xf32>
    %31 = arith.negf %30 : vector<6x128xf32>
    %32 = math.exp %31 : vector<6x128xf32>
    %cst_32 = arith.constant 1.000000e+00 : f32
    %33 = vector.broadcast %cst_32 : f32 to vector<6x128xf32>
    %34 = arith.addf %33, %32 : vector<6x128xf32>
    %35 = arith.divf %33, %34 : vector<6x128xf32>
    %36 = vector.extract_strided_slice %30 {offsets = [0, 64], sizes = [6, 32], strides = [1, 1]} : vector<6x128xf32> to vector<6x32xf32>
    %37 = math.tanh %36 : vector<6x32xf32>
    %38 = vector.extract_strided_slice %35 {offsets = [0, 0], sizes = [6, 32], strides = [1, 1]} : vector<6x128xf32> to vector<6x32xf32>
    %39 = vector.extract_strided_slice %35 {offsets = [0, 32], sizes = [6, 32], strides = [1, 1]} : vector<6x128xf32> to vector<6x32xf32>
    %40 = vector.extract_strided_slice %35 {offsets = [0, 96], sizes = [6, 32], strides = [1, 1]} : vector<6x128xf32> to vector<6x32xf32>
    %41 = arith.mulf %39, %25 : vector<6x32xf32>
    %42 = arith.mulf %38, %37 : vector<6x32xf32>
    %43 = arith.addf %41, %42 : vector<6x32xf32>
    %44 = math.tanh %43 : vector<6x32xf32>
    %45 = arith.mulf %40, %44 : vector<6x32xf32>
    %c1_i32 = arith.constant 1 : i32
    %46 = arith.index_cast %c1_i32 : i32 to index
    %c0_33 = arith.constant 0 : index
    %c0_34 = arith.constant 0 : index
    %47 = vector.load %arg12[%46, %c0_33, %c0_34] : memref<8x6x128xf32, #tpu.memory_space<vmem>>, vector<1x6x128xf32>
    %48 = vector.shape_cast %47 : vector<1x6x128xf32> to vector<6x128xf32>
    %cst_35 = arith.constant dense<0.000000e+00> : vector<6x128xf32>
    %49 = tpu.matmul %45, %4, %cst_35 {dimension_numbers = #tpu.dot_dimension_numbers<[1], [0], [0], [1], [0, 0, 1, 1], [], []>} : vector<6x32xf32>, vector<32x128xf32>, vector<6x128xf32> -> vector<6x128xf32>
    %50 = arith.addf %48, %49 : vector<6x128xf32>
    %51 = arith.negf %50 : vector<6x128xf32>
    %52 = math.exp %51 : vector<6x128xf32>
    %cst_36 = arith.constant 1.000000e+00 : f32
    %53 = vector.broadcast %cst_36 : f32 to vector<6x128xf32>
    %54 = arith.addf %53, %52 : vector<6x128xf32>
    %55 = arith.divf %53, %54 : vector<6x128xf32>
    %56 = vector.extract_strided_slice %50 {offsets = [0, 64], sizes = [6, 32], strides = [1, 1]} : vector<6x128xf32> to vector<6x32xf32>
    %57 = math.tanh %56 : vector<6x32xf32>
    %58 = vector.extract_strided_slice %55 {offsets = [0, 0], sizes = [6, 32], strides = [1, 1]} : vector<6x128xf32> to vector<6x32xf32>
    %59 = vector.extract_strided_slice %55 {offsets = [0, 32], sizes = [6, 32], strides = [1, 1]} : vector<6x128xf32> to vector<6x32xf32>
    %60 = vector.extract_strided_slice %55 {offsets = [0, 96], sizes = [6, 32], strides = [1, 1]} : vector<6x128xf32> to vector<6x32xf32>
    %61 = arith.mulf %59, %43 : vector<6x32xf32>
    %62 = arith.mulf %58, %57 : vector<6x32xf32>
    %63 = arith.addf %61, %62 : vector<6x32xf32>
    %64 = math.tanh %63 : vector<6x32xf32>
    %65 = arith.mulf %60, %64 : vector<6x32xf32>
    %c2_i32 = arith.constant 2 : i32
    %66 = arith.index_cast %c2_i32 : i32 to index
    %c0_37 = arith.constant 0 : index
    %c0_38 = arith.constant 0 : index
    %67 = vector.load %arg12[%66, %c0_37, %c0_38] : memref<8x6x128xf32, #tpu.memory_space<vmem>>, vector<1x6x128xf32>
    %68 = vector.shape_cast %67 : vector<1x6x128xf32> to vector<6x128xf32>
    %cst_39 = arith.constant dense<0.000000e+00> : vector<6x128xf32>
    %69 = tpu.matmul %65, %4, %cst_39 {dimension_numbers = #tpu.dot_dimension_numbers<[1], [0], [0], [1], [0, 0, 1, 1], [], []>} : vector<6x32xf32>, vector<32x128xf32>, vector<6x128xf32> -> vector<6x128xf32>
    %70 = arith.addf %68, %69 : vector<6x128xf32>
    %71 = arith.negf %70 : vector<6x128xf32>
    %72 = math.exp %71 : vector<6x128xf32>
    %cst_40 = arith.constant 1.000000e+00 : f32
    %73 = vector.broadcast %cst_40 : f32 to vector<6x128xf32>
    %74 = arith.addf %73, %72 : vector<6x128xf32>
    %75 = arith.divf %73, %74 : vector<6x128xf32>
    %76 = vector.extract_strided_slice %70 {offsets = [0, 64], sizes = [6, 32], strides = [1, 1]} : vector<6x128xf32> to vector<6x32xf32>
    %77 = math.tanh %76 : vector<6x32xf32>
    %78 = vector.extract_strided_slice %75 {offsets = [0, 0], sizes = [6, 32], strides = [1, 1]} : vector<6x128xf32> to vector<6x32xf32>
    %79 = vector.extract_strided_slice %75 {offsets = [0, 32], sizes = [6, 32], strides = [1, 1]} : vector<6x128xf32> to vector<6x32xf32>
    %80 = vector.extract_strided_slice %75 {offsets = [0, 96], sizes = [6, 32], strides = [1, 1]} : vector<6x128xf32> to vector<6x32xf32>
    %81 = arith.mulf %79, %63 : vector<6x32xf32>
    %82 = arith.mulf %78, %77 : vector<6x32xf32>
    %83 = arith.addf %81, %82 : vector<6x32xf32>
    %84 = math.tanh %83 : vector<6x32xf32>
    %85 = arith.mulf %80, %84 : vector<6x32xf32>
    %c3_i32 = arith.constant 3 : i32
    %86 = arith.index_cast %c3_i32 : i32 to index
    %c0_41 = arith.constant 0 : index
    %c0_42 = arith.constant 0 : index
    %87 = vector.load %arg12[%86, %c0_41, %c0_42] : memref<8x6x128xf32, #tpu.memory_space<vmem>>, vector<1x6x128xf32>
    %88 = vector.shape_cast %87 : vector<1x6x128xf32> to vector<6x128xf32>
    %cst_43 = arith.constant dense<0.000000e+00> : vector<6x128xf32>
    %89 = tpu.matmul %85, %4, %cst_43 {dimension_numbers = #tpu.dot_dimension_numbers<[1], [0], [0], [1], [0, 0, 1, 1], [], []>} : vector<6x32xf32>, vector<32x128xf32>, vector<6x128xf32> -> vector<6x128xf32>
    %90 = arith.addf %88, %89 : vector<6x128xf32>
    %91 = arith.negf %90 : vector<6x128xf32>
    %92 = math.exp %91 : vector<6x128xf32>
    %cst_44 = arith.constant 1.000000e+00 : f32
    %93 = vector.broadcast %cst_44 : f32 to vector<6x128xf32>
    %94 = arith.addf %93, %92 : vector<6x128xf32>
    %95 = arith.divf %93, %94 : vector<6x128xf32>
    %96 = vector.extract_strided_slice %90 {offsets = [0, 64], sizes = [6, 32], strides = [1, 1]} : vector<6x128xf32> to vector<6x32xf32>
    %97 = math.tanh %96 : vector<6x32xf32>
    %98 = vector.extract_strided_slice %95 {offsets = [0, 0], sizes = [6, 32], strides = [1, 1]} : vector<6x128xf32> to vector<6x32xf32>
    %99 = vector.extract_strided_slice %95 {offsets = [0, 32], sizes = [6, 32], strides = [1, 1]} : vector<6x128xf32> to vector<6x32xf32>
    %100 = vector.extract_strided_slice %95 {offsets = [0, 96], sizes = [6, 32], strides = [1, 1]} : vector<6x128xf32> to vector<6x32xf32>
    %101 = arith.mulf %99, %83 : vector<6x32xf32>
    %102 = arith.mulf %98, %97 : vector<6x32xf32>
    %103 = arith.addf %101, %102 : vector<6x32xf32>
    %104 = math.tanh %103 : vector<6x32xf32>
    %105 = arith.mulf %100, %104 : vector<6x32xf32>
    %c4_i32 = arith.constant 4 : i32
    %106 = arith.index_cast %c4_i32 : i32 to index
    %c0_45 = arith.constant 0 : index
    %c0_46 = arith.constant 0 : index
    %107 = vector.load %arg12[%106, %c0_45, %c0_46] : memref<8x6x128xf32, #tpu.memory_space<vmem>>, vector<1x6x128xf32>
    %108 = vector.shape_cast %107 : vector<1x6x128xf32> to vector<6x128xf32>
    %cst_47 = arith.constant dense<0.000000e+00> : vector<6x128xf32>
    %109 = tpu.matmul %105, %4, %cst_47 {dimension_numbers = #tpu.dot_dimension_numbers<[1], [0], [0], [1], [0, 0, 1, 1], [], []>} : vector<6x32xf32>, vector<32x128xf32>, vector<6x128xf32> -> vector<6x128xf32>
    %110 = arith.addf %108, %109 : vector<6x128xf32>
    %111 = arith.negf %110 : vector<6x128xf32>
    %112 = math.exp %111 : vector<6x128xf32>
    %cst_48 = arith.constant 1.000000e+00 : f32
    %113 = vector.broadcast %cst_48 : f32 to vector<6x128xf32>
    %114 = arith.addf %113, %112 : vector<6x128xf32>
    %115 = arith.divf %113, %114 : vector<6x128xf32>
    %116 = vector.extract_strided_slice %110 {offsets = [0, 64], sizes = [6, 32], strides = [1, 1]} : vector<6x128xf32> to vector<6x32xf32>
    %117 = math.tanh %116 : vector<6x32xf32>
    %118 = vector.extract_strided_slice %115 {offsets = [0, 0], sizes = [6, 32], strides = [1, 1]} : vector<6x128xf32> to vector<6x32xf32>
    %119 = vector.extract_strided_slice %115 {offsets = [0, 32], sizes = [6, 32], strides = [1, 1]} : vector<6x128xf32> to vector<6x32xf32>
    %120 = vector.extract_strided_slice %115 {offsets = [0, 96], sizes = [6, 32], strides = [1, 1]} : vector<6x128xf32> to vector<6x32xf32>
    %121 = arith.mulf %119, %103 : vector<6x32xf32>
    %122 = arith.mulf %118, %117 : vector<6x32xf32>
    %123 = arith.addf %121, %122 : vector<6x32xf32>
    %124 = math.tanh %123 : vector<6x32xf32>
    %125 = arith.mulf %120, %124 : vector<6x32xf32>
    %c5_i32 = arith.constant 5 : i32
    %126 = arith.index_cast %c5_i32 : i32 to index
    %c0_49 = arith.constant 0 : index
    %c0_50 = arith.constant 0 : index
    %127 = vector.load %arg12[%126, %c0_49, %c0_50] : memref<8x6x128xf32, #tpu.memory_space<vmem>>, vector<1x6x128xf32>
    %128 = vector.shape_cast %127 : vector<1x6x128xf32> to vector<6x128xf32>
    %cst_51 = arith.constant dense<0.000000e+00> : vector<6x128xf32>
    %129 = tpu.matmul %125, %4, %cst_51 {dimension_numbers = #tpu.dot_dimension_numbers<[1], [0], [0], [1], [0, 0, 1, 1], [], []>} : vector<6x32xf32>, vector<32x128xf32>, vector<6x128xf32> -> vector<6x128xf32>
    %130 = arith.addf %128, %129 : vector<6x128xf32>
    %131 = arith.negf %130 : vector<6x128xf32>
    %132 = math.exp %131 : vector<6x128xf32>
    %cst_52 = arith.constant 1.000000e+00 : f32
    %133 = vector.broadcast %cst_52 : f32 to vector<6x128xf32>
    %134 = arith.addf %133, %132 : vector<6x128xf32>
    %135 = arith.divf %133, %134 : vector<6x128xf32>
    %136 = vector.extract_strided_slice %130 {offsets = [0, 64], sizes = [6, 32], strides = [1, 1]} : vector<6x128xf32> to vector<6x32xf32>
    %137 = math.tanh %136 : vector<6x32xf32>
    %138 = vector.extract_strided_slice %135 {offsets = [0, 0], sizes = [6, 32], strides = [1, 1]} : vector<6x128xf32> to vector<6x32xf32>
    %139 = vector.extract_strided_slice %135 {offsets = [0, 32], sizes = [6, 32], strides = [1, 1]} : vector<6x128xf32> to vector<6x32xf32>
    %140 = vector.extract_strided_slice %135 {offsets = [0, 96], sizes = [6, 32], strides = [1, 1]} : vector<6x128xf32> to vector<6x32xf32>
    %141 = arith.mulf %139, %123 : vector<6x32xf32>
    %142 = arith.mulf %138, %137 : vector<6x32xf32>
    %143 = arith.addf %141, %142 : vector<6x32xf32>
    %144 = math.tanh %143 : vector<6x32xf32>
    %145 = arith.mulf %140, %144 : vector<6x32xf32>
    %c6_i32 = arith.constant 6 : i32
    %146 = arith.index_cast %c6_i32 : i32 to index
    %c0_53 = arith.constant 0 : index
    %c0_54 = arith.constant 0 : index
    %147 = vector.load %arg12[%146, %c0_53, %c0_54] : memref<8x6x128xf32, #tpu.memory_space<vmem>>, vector<1x6x128xf32>
    %148 = vector.shape_cast %147 : vector<1x6x128xf32> to vector<6x128xf32>
    %cst_55 = arith.constant dense<0.000000e+00> : vector<6x128xf32>
    %149 = tpu.matmul %145, %4, %cst_55 {dimension_numbers = #tpu.dot_dimension_numbers<[1], [0], [0], [1], [0, 0, 1, 1], [], []>} : vector<6x32xf32>, vector<32x128xf32>, vector<6x128xf32> -> vector<6x128xf32>
    %150 = arith.addf %148, %149 : vector<6x128xf32>
    %151 = arith.negf %150 : vector<6x128xf32>
    %152 = math.exp %151 : vector<6x128xf32>
    %cst_56 = arith.constant 1.000000e+00 : f32
    %153 = vector.broadcast %cst_56 : f32 to vector<6x128xf32>
    %154 = arith.addf %153, %152 : vector<6x128xf32>
    %155 = arith.divf %153, %154 : vector<6x128xf32>
    %156 = vector.extract_strided_slice %150 {offsets = [0, 64], sizes = [6, 32], strides = [1, 1]} : vector<6x128xf32> to vector<6x32xf32>
    %157 = math.tanh %156 : vector<6x32xf32>
    %158 = vector.extract_strided_slice %155 {offsets = [0, 0], sizes = [6, 32], strides = [1, 1]} : vector<6x128xf32> to vector<6x32xf32>
    %159 = vector.extract_strided_slice %155 {offsets = [0, 32], sizes = [6, 32], strides = [1, 1]} : vector<6x128xf32> to vector<6x32xf32>
    %160 = vector.extract_strided_slice %155 {offsets = [0, 96], sizes = [6, 32], strides = [1, 1]} : vector<6x128xf32> to vector<6x32xf32>
    %161 = arith.mulf %159, %143 : vector<6x32xf32>
    %162 = arith.mulf %158, %157 : vector<6x32xf32>
    %163 = arith.addf %161, %162 : vector<6x32xf32>
    %164 = math.tanh %163 : vector<6x32xf32>
    %165 = arith.mulf %160, %164 : vector<6x32xf32>
    %c7_i32 = arith.constant 7 : i32
    %166 = arith.index_cast %c7_i32 : i32 to index
    %c0_57 = arith.constant 0 : index
    %c0_58 = arith.constant 0 : index
    %167 = vector.load %arg12[%166, %c0_57, %c0_58] : memref<8x6x128xf32, #tpu.memory_space<vmem>>, vector<1x6x128xf32>
    %168 = vector.shape_cast %167 : vector<1x6x128xf32> to vector<6x128xf32>
    %cst_59 = arith.constant dense<0.000000e+00> : vector<6x128xf32>
    %169 = tpu.matmul %165, %4, %cst_59 {dimension_numbers = #tpu.dot_dimension_numbers<[1], [0], [0], [1], [0, 0, 1, 1], [], []>} : vector<6x32xf32>, vector<32x128xf32>, vector<6x128xf32> -> vector<6x128xf32>
    %170 = arith.addf %168, %169 : vector<6x128xf32>
    %171 = arith.negf %170 : vector<6x128xf32>
    %172 = math.exp %171 : vector<6x128xf32>
    %cst_60 = arith.constant 1.000000e+00 : f32
    %173 = vector.broadcast %cst_60 : f32 to vector<6x128xf32>
    %174 = arith.addf %173, %172 : vector<6x128xf32>
    %175 = arith.divf %173, %174 : vector<6x128xf32>
    %176 = vector.extract_strided_slice %170 {offsets = [0, 64], sizes = [6, 32], strides = [1, 1]} : vector<6x128xf32> to vector<6x32xf32>
    %177 = math.tanh %176 : vector<6x32xf32>
    %178 = vector.extract_strided_slice %175 {offsets = [0, 0], sizes = [6, 32], strides = [1, 1]} : vector<6x128xf32> to vector<6x32xf32>
    %179 = vector.extract_strided_slice %175 {offsets = [0, 32], sizes = [6, 32], strides = [1, 1]} : vector<6x128xf32> to vector<6x32xf32>
    %180 = vector.extract_strided_slice %175 {offsets = [0, 96], sizes = [6, 32], strides = [1, 1]} : vector<6x128xf32> to vector<6x32xf32>
    %181 = arith.mulf %179, %163 : vector<6x32xf32>
    %182 = arith.mulf %178, %177 : vector<6x32xf32>
    %183 = arith.addf %181, %182 : vector<6x32xf32>
    %184 = math.tanh %183 : vector<6x32xf32>
    %185 = arith.mulf %180, %184 : vector<6x32xf32>
    %c8_i32 = arith.constant 8 : i32
    %186 = vector.shape_cast %185 : vector<6x32xf32> to vector<2x3x32xf32>
    %187 = vector.shape_cast %5 : vector<1x32xf32> to vector<1x1x32xf32>
    %188 = vector.broadcast %187 : vector<1x1x32xf32> to vector<2x3x32xf32>
    %189 = arith.mulf %186, %188 : vector<2x3x32xf32>
    %cst_61 = arith.constant dense<0.000000e+00> : vector<2x3xf32>
    %190 = vector.multi_reduction <add>, %189, %cst_61 [2] : vector<2x3x32xf32> to vector<2x3xf32>
    %191 = vector.broadcast %6 : vector<1x1xf32> to vector<2x3xf32>
    %192 = arith.addf %190, %191 : vector<2x3xf32>
    %c0_62 = arith.constant 0 : index
    %c0_63 = arith.constant 0 : index
    %193 = vector.load %arg11[%c0_62, %c0_63] : memref<2x3xf32, #tpu.memory_space<vmem>>, vector<2x3xf32>
    tpu.vector_store %arg11[%c0_62, %c0_63], %192 {strides = array<i32>} : memref<2x3xf32, #tpu.memory_space<vmem>>, vector<2x3xf32>,
    return
  }
}

</mosaic_0001>

<llo_original>
// kernel: tpu_custom_call.1
$region0: #{tpu_custom_call.1}
  #allocation0 [shape = 'u32[]', space=smem, size = 0x4, offset = 0x4, fixed_abs, tag = 'smem constant byte address 0x4 - core index']
  #allocation1 [shape = 'u32[144,128]{1,0:T(1,128)}', space=vmem, size = 0x12000, scoped, tag = 'internal scratch']
  #allocation2 [shape = 'f32[8,6,128]{2,1,0:T(8,128)}', space=vmem, size = 0x8000, scoped, tag = 'scratch operand']
  #allocation3 [shape = 'f32[1,1]{1,0:T(1,128)S(1)}', space=vmem, size = 0x200, scoped, tag = 'scoped memory for tpu_custom_call.1']
  %s0 = inlined_call_operand.vmem [shape: f32[8,6,32], index: 0, kind: input, shape index: {}]
  %s1 = inlined_call_operand.hbm [shape: f32[6,16], index: 1, kind: input, shape index: {}]
  %s2 = inlined_call_operand.vmem [shape: f32[16,32], index: 2, kind: input, shape index: {}]
  %s3 = inlined_call_operand.vmem [shape: f32[1,32], index: 3, kind: input, shape index: {}]
  %s4 = inlined_call_operand.vmem [shape: f32[32,32], index: 4, kind: input, shape index: {}]
  %s5 = inlined_call_operand.vmem [shape: f32[1,32], index: 5, kind: input, shape index: {}]
  %s6 = inlined_call_operand.vmem [shape: f32[32,128], index: 6, kind: input, shape index: {}]
  %s7 = inlined_call_operand.vmem [shape: f32[32,128], index: 7, kind: input, shape index: {}]
  %s8 = inlined_call_operand.vmem [shape: f32[1,128], index: 8, kind: input, shape index: {}]
  %s9 = inlined_call_operand.vmem [shape: f32[1,32], index: 9, kind: input, shape index: {}]
  %s10 = inlined_call_operand.<no memory space> [shape: f32[1,1], index: 10, kind: input, shape index: {}]
  %s11 = inlined_call_operand.hbm [shape: f32[2,3], index: 11, kind: output, shape index: {}]
  %s12 = sld [smem:[#allocation0]]
  $region58: #{tpu_custom_call.1} parent=0
    _
  %s14 = ssub.s32 1, %s12
  %s15 = scalar_select 0, %s14, %s12
  %v16 = vstv %s10
  %17 = vst [vmem:[#allocation3] sm:$0x1] %v16
  $region1: #{tpu_custom_call.1} parent=0
    #allocation4 [shape = 'u8[4096]{0}', space=vmem, size = 0x1000, scoped, tag = 'input window, operand 1, single buffered']
    #allocation5 [shape = 's32[1]{0}', space=sflag, size = 0x4, scoped, tag = 'scoped memory for tpu_custom_call.1']
    #allocation6 [shape = 's32[1]{0}', space=sflag, size = 0x4, scoped, tag = 'scoped memory for tpu_custom_call.1']
    #allocation7 [shape = 'u8[1024]{0}', space=vmem, size = 0x400, scoped, tag = 'output window, operand 0, single buffered']
    %18 = vsyncpa [#allocation5], 0
    %19 = vsyncpa [#allocation6], 0
    // Predicated region
    $region2: #{tpu_custom_call.1} parent=1 // pred_check
      _
    $region3: #{tpu_custom_call.1} parent=1 // pred_check_branch
      %21 = sbr.rel (0) target = $region5
    $region4: #{tpu_custom_call.1} parent=1 // pred_region
      _
    $region5: #{tpu_custom_call.1} parent=1 // pred_fallthru
      _
    // Predicated region
    $region6: #{tpu_custom_call.1} parent=1 // pred_check
      _
    $region7: #{tpu_custom_call.1} parent=1 // pred_check_branch
      %23 = sbr.rel (0) target = $region9
    $region8: #{tpu_custom_call.1} parent=1 // pred_region
      %s25 = ssub.s32 128, 128
      %26 = vsyncadd [#allocation5], %s25
      %s28 = sshll.u32 [#allocation4], 4
      %s29 = int_to_ptr.vmem [resolvable:$true] %s28
      %31 = dma.hbm_to_vmem [thread:$0]  %s1, 128, %s29, [#allocation5]
    $region9: #{tpu_custom_call.1} parent=1 // pred_fallthru
      _
    // Predicated region
    $region10: #{tpu_custom_call.1} parent=1 // pred_check
      _
    $region11: #{tpu_custom_call.1} parent=1 // pred_check_branch
      %33 = sbr.rel (0) target = $region13
    $region12: #{tpu_custom_call.1} parent=1 // pred_region
      _
    $region13: #{tpu_custom_call.1} parent=1 // pred_fallthru
      _
    // Predicated region
    $region14: #{tpu_custom_call.1} parent=1 // pred_check
      _
    $region15: #{tpu_custom_call.1} parent=1 // pred_check_branch
      %35 = sbr.rel (0) target = $region17
    $region16: #{tpu_custom_call.1} parent=1 // pred_region
      _
    $region17: #{tpu_custom_call.1} parent=1 // pred_fallthru
      _
    // Predicated region
    $region18: #{tpu_custom_call.1} parent=1 // pred_check
      _
    $region19: #{tpu_custom_call.1} parent=1 // pred_check_branch
      %37 = sbr.rel (0) target = $region21
    $region20: #{tpu_custom_call.1} parent=1 // pred_region
      _
    $region21: #{tpu_custom_call.1} parent=1 // pred_fallthru
      _
    // Predicated region
    $region22: #{tpu_custom_call.1} parent=1 // pred_check
      _
    $region23: #{tpu_custom_call.1} parent=1 // pred_check_branch
      %39 = sbr.rel (0) target = $region25
    $region24: #{tpu_custom_call.1} parent=1 // pred_region
      _
    $region25: #{tpu_custom_call.1} parent=1 // pred_fallthru
      _
    // Predicated region
    $region26: #{tpu_custom_call.1} parent=1 // pred_check
      _
    $region27: #{tpu_custom_call.1} parent=1 // pred_check_branch
      %41 = sbr.rel (0) target = $region29
    $region28: #{tpu_custom_call.1} parent=1 // pred_region
      _
    $region29: #{tpu_custom_call.1} parent=1 // pred_fallthru
      _
    // Predicated region
    $region30: #{tpu_custom_call.1} parent=1 // pred_check
      _
    $region31: #{tpu_custom_call.1} parent=1 // pred_check_branch
      %43 = sbr.rel (0) target = $region33
    $region32: #{tpu_custom_call.1} parent=1 // pred_region
      _
    $region33: #{tpu_custom_call.1} parent=1 // pred_fallthru
      _
    // Predicated region
    $region34: #{tpu_custom_call.1} parent=1 // pred_check
      _
    $region35: #{tpu_custom_call.1} parent=1 // pred_check_branch
      %45 = sbr.rel (0) target = $region37
    $region36: #{tpu_custom_call.1} parent=1 // pred_region
      _
    $region37: #{tpu_custom_call.1} parent=1 // pred_fallthru
      _
    // Predicated region
    $region38: #{tpu_custom_call.1} parent=1 // pred_check
      _
    $region39: #{tpu_custom_call.1} parent=1 // pred_check_branch
      %47 = sbr.rel (0) target = $region41
    $region40: #{tpu_custom_call.1} parent=1 // pred_region
      _
    $region41: #{tpu_custom_call.1} parent=1 // pred_fallthru
      _
    // Predicated region
    $region42: #{tpu_custom_call.1} parent=1 // pred_check
      _
    $region43: #{tpu_custom_call.1} parent=1 // pred_check_branch
      %49 = sbr.rel (0) target = $region45
    $region44: #{tpu_custom_call.1} parent=1 // pred_region
      _
    $region45: #{tpu_custom_call.1} parent=1 // pred_fallthru
      _
    // Predicated region
    $region46: #{tpu_custom_call.1} parent=1 // pred_check
      _
    $region47: #{tpu_custom_call.1} parent=1 // pred_check_branch
      %51 = sbr.rel (0) target = $region49
    $region48: #{tpu_custom_call.1} parent=1 // pred_region
      %52 = dma.done [#allocation5], 128
    $region49: #{tpu_custom_call.1} parent=1 // pred_fallthru
      _
    %v53 = vld [vmem:[%s2] sm:$0xff]
    %v54 = vld [vmem:[%s2 + $0x8] sm:$0xff]
    %v55 = vld [vmem:[%s3] sm:$0x1]
    %v56 = vld [vmem:[%s4] sm:$0xff]
    %v57 = vld [vmem:[%s4 + $0x8] sm:$0xff]
    %v58 = vld [vmem:[%s4 + $0x10] sm:$0xff]
    %v59 = vld [vmem:[%s4 + $0x18] sm:$0xff]
    %v60 = vld [vmem:[%s5] sm:$0x1]
    %v61 = vld [vmem:[%s7] sm:$0xff]
    %v62 = vld [vmem:[%s7 + $0x8] sm:$0xff]
    %v63 = vld [vmem:[%s7 + $0x10] sm:$0xff]
    %v64 = vld [vmem:[%s7 + $0x18] sm:$0xff]
    %v65 = vld [vmem:[%s9] sm:$0x1]
    %v66 = vld [vmem:[#allocation3] sm:$0x1]
    %v67 = vld [vmem:[%s0] sm:$0x3f]
    %v68 = vld [vmem:[%s0 + $0x8] sm:$0x3f]
    %v69 = vld [vmem:[%s0 + $0x10] sm:$0x3f]
    %v70 = vld [vmem:[%s0 + $0x18] sm:$0x3f]
    %v71 = vld [vmem:[%s0 + $0x20] sm:$0x3f]
    %v72 = vld [vmem:[%s0 + $0x28] sm:$0x3f]
    %v73 = vld [vmem:[%s0 + $0x30] sm:$0x3f]
    %v74 = vld [vmem:[%s0 + $0x38] sm:$0x3f]
    %v83 = vcombine.high %v67, %v67
    %v85 = vunpack.c.l.s4 1983009808
    %v86 = vunpack.c.0.s8 %v85
    %v87 = vlaneseq
    %v88 = vshrl.u32 %v87, 7
    %v89 = vsub.s32 %v86, %v88
    %v90 = vrot.slane %v67, %v89
    %v92 = vunpack.c.l.s4 1983009808
    %v93 = vunpack.c.0.s8 %v92
    %v94 = vlaneseq
    %v95 = vshrl.u32 %v94, 7
    %v96 = vsub.s32 %v93, %v95
    %v97 = vrot.slane %v83, %v96
    %v98 = vcombine.high %v90, %v90
    %v99 = vcombine.high %v68, %v68
    %v101 = vunpack.c.l.s4 1983009808
    %v102 = vunpack.c.0.s8 %v101
    %v103 = vlaneseq
    %v104 = vshrl.u32 %v103, 7
    %v105 = vsub.s32 %v102, %v104
    %v106 = vrot.slane %v68, %v105
    %v108 = vunpack.c.l.s4 1983009808
    %v109 = vunpack.c.0.s8 %v108
    %v110 = vlaneseq
    %v111 = vshrl.u32 %v110, 7
    %v112 = vsub.s32 %v109, %v111
    %v113 = vrot.slane %v99, %v112
    %v114 = vcombine.high %v106, %v106
    %v115 = vcombine.high %v69, %v69
    %v117 = vunpack.c.l.s4 1983009808
    %v118 = vunpack.c.0.s8 %v117
    %v119 = vlaneseq
    %v120 = vshrl.u32 %v119, 7
    %v121 = vsub.s32 %v118, %v120
    %v122 = vrot.slane %v69, %v121
    %v124 = vunpack.c.l.s4 1983009808
    %v125 = vunpack.c.0.s8 %v124
    %v126 = vlaneseq
    %v127 = vshrl.u32 %v126, 7
    %v128 = vsub.s32 %v125, %v127
    %v129 = vrot.slane %v115, %v128
    %v130 = vcombine.high %v122, %v122
    %v131 = vcombine.high %v70, %v70
    %v133 = vunpack.c.l.s4 1983009808
    %v134 = vunpack.c.0.s8 %v133
    %v135 = vlaneseq
    %v136 = vshrl.u32 %v135, 7
    %v137 = vsub.s32 %v134, %v136
    %v138 = vrot.slane %v70, %v137
    %v140 = vunpack.c.l.s4 1983009808
    %v141 = vunpack.c.0.s8 %v140
    %v142 = vlaneseq
    %v143 = vshrl.u32 %v142, 7
    %v144 = vsub.s32 %v141, %v143
    %v145 = vrot.slane %v131, %v144
    %v146 = vcombine.high %v138, %v138
    %v147 = vcombine.high %v71, %v71
    %v149 = vunpack.c.l.s4 1983009808
    %v150 = vunpack.c.0.s8 %v149
    %v151 = vlaneseq
    %v152 = vshrl.u32 %v151, 7
    %v153 = vsub.s32 %v150, %v152
    %v154 = vrot.slane %v71, %v153
    %v156 = vunpack.c.l.s4 1983009808
    %v157 = vunpack.c.0.s8 %v156
    %v158 = vlaneseq
    %v159 = vshrl.u32 %v158, 7
    %v160 = vsub.s32 %v157, %v159
    %v161 = vrot.slane %v147, %v160
    %v162 = vcombine.high %v154, %v154
    %v163 = vcombine.high %v72, %v72
    %v165 = vunpack.c.l.s4 1983009808
    %v166 = vunpack.c.0.s8 %v165
    %v167 = vlaneseq
    %v168 = vshrl.u32 %v167, 7
    %v169 = vsub.s32 %v166, %v168
    %v170 = vrot.slane %v72, %v169
    %v172 = vunpack.c.l.s4 1983009808
    %v173 = vunpack.c.0.s8 %v172
    %v174 = vlaneseq
    %v175 = vshrl.u32 %v174, 7
    %v176 = vsub.s32 %v173, %v175
    %v177 = vrot.slane %v163, %v176
    %v178 = vcombine.high %v170, %v170
    %v179 = vcombine.high %v73, %v73
    %v181 = vunpack.c.l.s4 1983009808
    %v182 = vunpack.c.0.s8 %v181
    %v183 = vlaneseq
    %v184 = vshrl.u32 %v183, 7
    %v185 = vsub.s32 %v182, %v184
    %v186 = vrot.slane %v73, %v185
    %v188 = vunpack.c.l.s4 1983009808
    %v189 = vunpack.c.0.s8 %v188
    %v190 = vlaneseq
    %v191 = vshrl.u32 %v190, 7
    %v192 = vsub.s32 %v189, %v191
    %v193 = vrot.slane %v179, %v192
    %v194 = vcombine.high %v186, %v186
    %v195 = vcombine.high %v74, %v74
    %v197 = vunpack.c.l.s4 1983009808
    %v198 = vunpack.c.0.s8 %v197
    %v199 = vlaneseq
    %v200 = vshrl.u32 %v199, 7
    %v201 = vsub.s32 %v198, %v200
    %v202 = vrot.slane %v74, %v201
    %v204 = vunpack.c.l.s4 1983009808
    %v205 = vunpack.c.0.s8 %v204
    %v206 = vlaneseq
    %v207 = vshrl.u32 %v206, 7
    %v208 = vsub.s32 %v205, %v207
    %v209 = vrot.slane %v195, %v208
    %v210 = vcombine.high %v202, %v202
    %v211 = vld [vmem:[%s6] sm:$0xff]
    %v212 = vld [vmem:[%s6 + $0x8] sm:$0xff]
    %v213 = vld [vmem:[%s6 + $0x10] sm:$0xff]
    %v214 = vld [vmem:[%s6 + $0x18] sm:$0xff]
    %v215 = vld [vmem:[%s8] sm:$0x1]
    %v217 = vlaneseq
    %v218 = vshrl.u32 %v217, 7
    %v219 = vsub.s32 0, %v218
    %v220 = vrot.slane %v215, %v219
    %v222 = vcombine.low %v90, %v98
    %v223 = vcombine.low %v97, %v106
    %v225 = vunpack.c.l.s4 1983009808
    %v226 = vunpack.c.0.s8 %v225
    %v227 = vlaneseq
    %v228 = vshrl.u32 %v227, 7
    %v229 = vsub.s32 %v226, %v228
    %v230 = vrot.slane %v222, %v229
    %v232 = vunpack.c.l.s4 1983009808
    %v233 = vunpack.c.0.s8 %v232
    %v234 = vlaneseq
    %v235 = vshrl.u32 %v234, 7
    %v236 = vsub.s32 %v233, %v235
    %v237 = vrot.slane %v223, %v236
    %v238 = vcombine.low %v230, %v237
    %v239 = vcombine.low %v114, %v113
    %v240 = vcombine.low %v122, %v130
    %v242 = vunpack.c.l.s4 1983009808
    %v243 = vunpack.c.0.s8 %v242
    %v244 = vlaneseq
    %v245 = vshrl.u32 %v244, 7
    %v246 = vsub.s32 %v243, %v245
    %v247 = vrot.slane %v239, %v246
    %v249 = vunpack.c.l.s4 1983009808
    %v250 = vunpack.c.0.s8 %v249
    %v251 = vlaneseq
    %v252 = vshrl.u32 %v251, 7
    %v253 = vsub.s32 %v250, %v252
    %v254 = vrot.slane %v240, %v253
    %v255 = vcombine.low %v247, %v254
    %v256 = vcombine.low %v129, %v138
    %v257 = vcombine.low %v146, %v145
    %v259 = vunpack.c.l.s4 1983009808
    %v260 = vunpack.c.0.s8 %v259
    %v261 = vlaneseq
    %v262 = vshrl.u32 %v261, 7
    %v263 = vsub.s32 %v260, %v262
    %v264 = vrot.slane %v256, %v263
    %v266 = vunpack.c.l.s4 1983009808
    %v267 = vunpack.c.0.s8 %v266
    %v268 = vlaneseq
    %v269 = vshrl.u32 %v268, 7
    %v270 = vsub.s32 %v267, %v269
    %v271 = vrot.slane %v257, %v270
    %v272 = vcombine.low %v264, %v271
    %v273 = vcombine.low %v154, %v162
    %v274 = vcombine.low %v161, %v170
    %v276 = vunpack.c.l.s4 1983009808
    %v277 = vunpack.c.0.s8 %v276
    %v278 = vlaneseq
    %v279 = vshrl.u32 %v278, 7
    %v280 = vsub.s32 %v277, %v279
    %v281 = vrot.slane %v273, %v280
    %v283 = vunpack.c.l.s4 1983009808
    %v284 = vunpack.c.0.s8 %v283
    %v285 = vlaneseq
    %v286 = vshrl.u32 %v285, 7
    %v287 = vsub.s32 %v284, %v286
    %v288 = vrot.slane %v274, %v287
    %v289 = vcombine.low %v281, %v288
    %v290 = vcombine.low %v178, %v177
    %v291 = vcombine.low %v186, %v194
    %v293 = vunpack.c.l.s4 1983009808
    %v294 = vunpack.c.0.s8 %v293
    %v295 = vlaneseq
    %v296 = vshrl.u32 %v295, 7
    %v297 = vsub.s32 %v294, %v296
    %v298 = vrot.slane %v290, %v297
    %v300 = vunpack.c.l.s4 1983009808
    %v301 = vunpack.c.0.s8 %v300
    %v302 = vlaneseq
    %v303 = vshrl.u32 %v302, 7
    %v304 = vsub.s32 %v301, %v303
    %v305 = vrot.slane %v291, %v304
    %v306 = vcombine.low %v298, %v305
    %v307 = vcombine.low %v193, %v202
    %v308 = vcombine.low %v210, %v209
    %v310 = vunpack.c.l.s4 1983009808
    %v311 = vunpack.c.0.s8 %v310
    %v312 = vlaneseq
    %v313 = vshrl.u32 %v312, 7
    %v314 = vsub.s32 %v311, %v313
    %v315 = vrot.slane %v307, %v314
    %v317 = vunpack.c.l.s4 1983009808
    %v318 = vunpack.c.0.s8 %v317
    %v319 = vlaneseq
    %v320 = vshrl.u32 %v319, 7
    %v321 = vsub.s32 %v318, %v320
    %v322 = vrot.slane %v308, %v321
    %v323 = vcombine.low %v315, %v322
    %vm324 = vcmask 261120
    %v325 = vsel %vm324, %v238, 0
    %v327 = vsel %vm324, %v255, 0
    %v329 = vsel %vm324, %v272, 0
    %v331 = vsel %vm324, %v289, 0
    %v333 = vsel %vm324, %v306, 0
    %v335 = vsel %vm324, %v323, 0
    %337 = vmatprep.subr.mxu0 0.0
    %338 = vmatpush1.msra.mxu0 %v211
    %339 = vmatprep.subr.mxu0 0.0
    %340 = vmatpush1.msra.mxu0 %v212
    %341 = vmatprep.subr.mxu0 0.0
    %342 = vmatpush1.msra.mxu0 %v213
    %343 = vmatprep.subr.mxu0 0.0
    %344 = vmatpush1.msra.mxu0 %v214
    %345 = vmatprep.subr.mxu0 0.0
    %346 = vmatpush1.msra.mxu0 0.0
    %347 = vmatprep.subr.mxu0 0.0
    %348 = vmatpush1.msra.mxu0 0.0
    %349 = vmatprep.subr.mxu0 0.0
    %350 = vmatpush1.msra.mxu0 0.0
    %351 = vmatprep.subr.mxu0 0.0
    %352 = vmatpush1.msra.mxu0 0.0
    %353 = vmatprep.subr.mxu0 0.0
    %354 = vmatpush1.msra.mxu0 0.0
    %355 = vmatprep.subr.mxu0 0.0
    %356 = vmatpush1.msra.mxu0 0.0
    %357 = vmatprep.subr.mxu0 0.0
    %358 = vmatpush1.msra.mxu0 0.0
    %359 = vmatprep.subr.mxu0 0.0
    %360 = vmatpush1.msra.mxu0 0.0
    %361 = vmatprep.subr.mxu0 0.0
    %362 = vmatpush1.msra.mxu0 0.0
    %363 = vmatprep.subr.mxu0 0.0
    %364 = vmatpush1.msra.mxu0 0.0
    %365 = vmatprep.subr.mxu0 0.0
    %366 = vmatpush1.msra.mxu0 0.0
    %367 = vmatprep.subr.mxu0 0.0
    %368 = vmatpush1.msra.mxu0 0.0
    %369 = vmatprep.subr.mxu0 0.0
    %370 = vmatpush1.msra.mxu0 0.0
    %371 = vmatprep.subr.mxu0 0.0
    %372 = vmatpush1.msra.mxu0 0.0
    %373 = vmatprep.subr.mxu0 0.0
    %374 = vmatpush1.msra.mxu0 0.0
    %375 = vmatprep.subr.mxu0 0.0
    %376 = vmatpush1.msra.mxu0 0.0
    %377 = vmatprep.subr.mxu0 0.0
    %378 = vmatpush1.msra.mxu0 0.0
    %379 = vmatprep.subr.mxu0 0.0
    %380 = vmatpush1.msra.mxu0 0.0
    %381 = vmatprep.subr.mxu0 0.0
    %382 = vmatpush1.msra.mxu0 0.0
    %383 = vmatprep.subr.mxu0 0.0
    %384 = vmatpush1.msra.mxu0 0.0
    %385 = vmatprep.subr.mxu0 0.0
    %386 = vmatpush1.msra.mxu0 0.0
    %387 = vmatprep.subr.mxu0 0.0
    %388 = vmatpush1.msra.mxu0 0.0
    %389 = vmatprep.subr.mxu0 0.0
    %390 = vmatpush1.msra.mxu0 0.0
    %391 = vmatprep.subr.mxu0 0.0
    %392 = vmatpush1.msra.mxu0 0.0
    %393 = vmatprep.subr.mxu0 0.0
    %394 = vmatpush1.msra.mxu0 0.0
    %395 = vmatprep.subr.mxu0 0.0
    %396 = vmatpush1.msra.mxu0 0.0
    %397 = vmatprep.subr.mxu0 0.0
    %398 = vmatpush1.msra.mxu0 0.0
    %399 = vmatprep.subr.mxu0 0.0
    %400 = vmatpush1.msra.mxu0 0.0
    %401 = vmatprep.mubr.f32.mxu0 0.0
    %402 = vmatmul.mubr.f32.gmra.mrb[0].mxu0 %v325
    %v403 = vpop.f32.mrb[0].mxu0
    %v404 = vadd.f32 %v220, %v403
    %v405 = vpop.f32.mrb[0].mxu0
    %406 = vmatprep.mubr.f32.mxu0 0.0
    %407 = vmatmul.mubr.f32.gmra.mrb[0].mxu0 %v327
    %v408 = vpop.f32.mrb[0].mxu0
    %v409 = vadd.f32 %v220, %v408
    %v410 = vpop.f32.mrb[0].mxu0
    %411 = vmatprep.mubr.f32.mxu0 0.0
    %412 = vmatmul.mubr.f32.gmra.mrb[0].mxu0 %v329
    %v413 = vpop.f32.mrb[0].mxu0
    %v414 = vadd.f32 %v220, %v413
    %v415 = vpop.f32.mrb[0].mxu0
    %416 = vmatprep.mubr.f32.mxu0 0.0
    %417 = vmatmul.mubr.f32.gmra.mrb[0].mxu0 %v331
    %v418 = vpop.f32.mrb[0].mxu0
    %v419 = vadd.f32 %v220, %v418
    %v420 = vpop.f32.mrb[0].mxu0
    %421 = vmatprep.mubr.f32.mxu0 0.0
    %422 = vmatmul.mubr.f32.gmra.mrb[0].mxu0 %v333
    %v423 = vpop.f32.mrb[0].mxu0
    %v424 = vadd.f32 %v220, %v423
    %v425 = vpop.f32.mrb[0].mxu0
    %426 = vmatprep.mubr.f32.mxu0 0.0
    %427 = vmatmul.mubr.f32.gmra.mrb[0].mxu0 %v335
    %v428 = vpop.f32.mrb[0].mxu0
    %v429 = vadd.f32 %v220, %v428
    %v430 = vpop.f32.mrb[0].mxu0
    %431 = vdwg.mxu0
    %v438 = vcombine.high %v404, %v404
    %v440 = vunpack.c.l.s4 1983009808
    %v441 = vunpack.c.0.s8 %v440
    %v442 = vlaneseq
    %v443 = vshrl.u32 %v442, 7
    %v444 = vsub.s32 %v441, %v443
    %v445 = vrot.slane %v404, %v444
    %v447 = vunpack.c.l.s4 1983009808
    %v448 = vunpack.c.0.s8 %v447
    %v449 = vlaneseq
    %v450 = vshrl.u32 %v449, 7
    %v451 = vsub.s32 %v448, %v450
    %v452 = vrot.slane %v438, %v451
    %v453 = vcombine.high %v445, %v445
    %v454 = vcombine.high %v452, %v452
    %v455 = vcombine.high %v409, %v409
    %v457 = vunpack.c.l.s4 1983009808
    %v458 = vunpack.c.0.s8 %v457
    %v459 = vlaneseq
    %v460 = vshrl.u32 %v459, 7
    %v461 = vsub.s32 %v458, %v460
    %v462 = vrot.slane %v409, %v461
    %v464 = vunpack.c.l.s4 1983009808
    %v465 = vunpack.c.0.s8 %v464
    %v466 = vlaneseq
    %v467 = vshrl.u32 %v466, 7
    %v468 = vsub.s32 %v465, %v467
    %v469 = vrot.slane %v455, %v468
    %v470 = vcombine.high %v462, %v462
    %v471 = vcombine.high %v469, %v469
    %v472 = vcombine.high %v414, %v414
    %v474 = vunpack.c.l.s4 1983009808
    %v475 = vunpack.c.0.s8 %v474
    %v476 = vlaneseq
    %v477 = vshrl.u32 %v476, 7
    %v478 = vsub.s32 %v475, %v477
    %v479 = vrot.slane %v414, %v478
    %v481 = vunpack.c.l.s4 1983009808
    %v482 = vunpack.c.0.s8 %v481
    %v483 = vlaneseq
    %v484 = vshrl.u32 %v483, 7
    %v485 = vsub.s32 %v482, %v484
    %v486 = vrot.slane %v472, %v485
    %v487 = vcombine.high %v479, %v479
    %v488 = vcombine.high %v486, %v486
    %v489 = vcombine.high %v419, %v419
    %v491 = vunpack.c.l.s4 1983009808
    %v492 = vunpack.c.0.s8 %v491
    %v493 = vlaneseq
    %v494 = vshrl.u32 %v493, 7
    %v495 = vsub.s32 %v492, %v494
    %v496 = vrot.slane %v419, %v495
    %v498 = vunpack.c.l.s4 1983009808
    %v499 = vunpack.c.0.s8 %v498
    %v500 = vlaneseq
    %v501 = vshrl.u32 %v500, 7
    %v502 = vsub.s32 %v499, %v501
    %v503 = vrot.slane %v489, %v502
    %v504 = vcombine.high %v496, %v496
    %v505 = vcombine.high %v503, %v503
    %v506 = vcombine.high %v424, %v424
    %v508 = vunpack.c.l.s4 1983009808
    %v509 = vunpack.c.0.s8 %v508
    %v510 = vlaneseq
    %v511 = vshrl.u32 %v510, 7
    %v512 = vsub.s32 %v509, %v511
    %v513 = vrot.slane %v424, %v512
    %v515 = vunpack.c.l.s4 1983009808
    %v516 = vunpack.c.0.s8 %v515
    %v517 = vlaneseq
    %v518 = vshrl.u32 %v517, 7
    %v519 = vsub.s32 %v516, %v518
    %v520 = vrot.slane %v506, %v519
    %v521 = vcombine.high %v513, %v513
    %v522 = vcombine.high %v520, %v520
    %v523 = vcombine.high %v429, %v429
    %v525 = vunpack.c.l.s4 1983009808
    %v526 = vunpack.c.0.s8 %v525
    %v527 = vlaneseq
    %v528 = vshrl.u32 %v527, 7
    %v529 = vsub.s32 %v526, %v528
    %v530 = vrot.slane %v429, %v529
    %v532 = vunpack.c.l.s4 1983009808
    %v533 = vunpack.c.0.s8 %v532
    %v534 = vlaneseq
    %v535 = vshrl.u32 %v534, 7
    %v536 = vsub.s32 %v533, %v535
    %v537 = vrot.slane %v523, %v536
    %v538 = vcombine.high %v530, %v530
    %v539 = vcombine.high %v537, %v537
    %v540 = vcombine.low %v445, %v453
    %v542 = vunpack.c.l.s4 1983009808
    %v543 = vunpack.c.0.s8 %v542
    %v544 = vlaneseq
    %v545 = vshrl.u32 %v544, 7
    %v546 = vsub.s32 %v543, %v545
    %v547 = vrot.slane %v540, %v546
    %v549 = vunpack.c.l.s4 1983009808
    %v550 = vunpack.c.0.s8 %v549
    %v551 = vlaneseq
    %v552 = vshrl.u32 %v551, 7
    %v553 = vsub.s32 %v550, %v552
    %v554 = vrot.slane %v452, %v553
    %v555 = vcombine.low %v547, %v554
    %v556 = vcombine.low %v454, %v462
    %v558 = vunpack.c.l.s4 1983009808
    %v559 = vunpack.c.0.s8 %v558
    %v560 = vlaneseq
    %v561 = vshrl.u32 %v560, 7
    %v562 = vsub.s32 %v559, %v561
    %v563 = vrot.slane %v556, %v562
    %v565 = vunpack.c.l.s4 1983009808
    %v566 = vunpack.c.0.s8 %v565
    %v567 = vlaneseq
    %v568 = vshrl.u32 %v567, 7
    %v569 = vsub.s32 %v566, %v568
    %v570 = vrot.slane %v470, %v569
    %v571 = vcombine.low %v563, %v570
    %v572 = vcombine.low %v469, %v471
    %v574 = vunpack.c.l.s4 1983009808
    %v575 = vunpack.c.0.s8 %v574
    %v576 = vlaneseq
    %v577 = vshrl.u32 %v576, 7
    %v578 = vsub.s32 %v575, %v577
    %v579 = vrot.slane %v572, %v578
    %v581 = vunpack.c.l.s4 1983009808
    %v582 = vunpack.c.0.s8 %v581
    %v583 = vlaneseq
    %v584 = vshrl.u32 %v583, 7
    %v585 = vsub.s32 %v582, %v584
    %v586 = vrot.slane %v479, %v585
    %v587 = vcombine.low %v579, %v586
    %v588 = vcombine.low %v487, %v486
    %v590 = vunpack.c.l.s4 1983009808
    %v591 = vunpack.c.0.s8 %v590
    %v592 = vlaneseq
    %v593 = vshrl.u32 %v592, 7
    %v594 = vsub.s32 %v591, %v593
    %v595 = vrot.slane %v588, %v594
    %v597 = vunpack.c.l.s4 1983009808
    %v598 = vunpack.c.0.s8 %v597
    %v599 = vlaneseq
    %v600 = vshrl.u32 %v599, 7
    %v601 = vsub.s32 %v598, %v600
    %v602 = vrot.slane %v488, %v601
    %v603 = vcombine.low %v595, %v602
    %v604 = vcombine.low %v496, %v504
    %v606 = vunpack.c.l.s4 1983009808
    %v607 = vunpack.c.0.s8 %v606
    %v608 = vlaneseq
    %v609 = vshrl.u32 %v608, 7
    %v610 = vsub.s32 %v607, %v609
    %v611 = vrot.slane %v604, %v610
    %v613 = vunpack.c.l.s4 1983009808
    %v614 = vunpack.c.0.s8 %v613
    %v615 = vlaneseq
    %v616 = vshrl.u32 %v615, 7
    %v617 = vsub.s32 %v614, %v616
    %v618 = vrot.slane %v503, %v617
    %v619 = vcombine.low %v611, %v618
    %v620 = vcombine.low %v505, %v513
    %v622 = vunpack.c.l.s4 1983009808
    %v623 = vunpack.c.0.s8 %v622
    %v624 = vlaneseq
    %v625 = vshrl.u32 %v624, 7
    %v626 = vsub.s32 %v623, %v625
    %v627 = vrot.slane %v620, %v626
    %v629 = vunpack.c.l.s4 1983009808
    %v630 = vunpack.c.0.s8 %v629
    %v631 = vlaneseq
    %v632 = vshrl.u32 %v631, 7
    %v633 = vsub.s32 %v630, %v632
    %v634 = vrot.slane %v521, %v633
    %v635 = vcombine.low %v627, %v634
    %v636 = vcombine.low %v520, %v522
    %v638 = vunpack.c.l.s4 1983009808
    %v639 = vunpack.c.0.s8 %v638
    %v640 = vlaneseq
    %v641 = vshrl.u32 %v640, 7
    %v642 = vsub.s32 %v639, %v641
    %v643 = vrot.slane %v636, %v642
    %v645 = vunpack.c.l.s4 1983009808
    %v646 = vunpack.c.0.s8 %v645
    %v647 = vlaneseq
    %v648 = vshrl.u32 %v647, 7
    %v649 = vsub.s32 %v646, %v648
    %v650 = vrot.slane %v530, %v649
    %v651 = vcombine.low %v643, %v650
    %v652 = vcombine.low %v538, %v537
    %v654 = vunpack.c.l.s4 1983009808
    %v655 = vunpack.c.0.s8 %v654
    %v656 = vlaneseq
    %v657 = vshrl.u32 %v656, 7
    %v658 = vsub.s32 %v655, %v657
    %v659 = vrot.slane %v652, %v658
    %v661 = vunpack.c.l.s4 1983009808
    %v662 = vunpack.c.0.s8 %v661
    %v663 = vlaneseq
    %v664 = vshrl.u32 %v663, 7
    %v665 = vsub.s32 %v662, %v664
    %v666 = vrot.slane %v539, %v665
    %v667 = vcombine.low %v659, %v666
    %676 = vst [vmem:[#allocation2] sm:$0x3f] %v555
    %677 = vst [vmem:[#allocation2 + $0x8] sm:$0x3f] %v571
    %678 = vst [vmem:[#allocation2 + $0x10] sm:$0x3f] %v587
    %679 = vst [vmem:[#allocation2 + $0x18] sm:$0x3f] %v603
    %680 = vst [vmem:[#allocation2 + $0x20] sm:$0x3f] %v619
    %681 = vst [vmem:[#allocation2 + $0x28] sm:$0x3f] %v635
    %682 = vst [vmem:[#allocation2 + $0x30] sm:$0x3f] %v651
    %683 = vst [vmem:[#allocation2 + $0x38] sm:$0x3f] %v667
    %v684 = vld [vmem:[#allocation4] sm:$0x3f]
    %v686 = vlaneseq
    %v687 = vshrl.u32 %v686, 7
    %v688 = vsub.s32 0, %v687
    %v689 = vrot.slane %v55, %v688
    %vm691 = vcmask 130048
    %v693 = vsel %vm691, %v684, 0
    %695 = vmatprep.subr.mxu0 0.0
    %696 = vmatpush1.msra.mxu0 %v53
    %697 = vmatprep.subr.mxu0 0.0
    %698 = vmatpush1.msra.mxu0 %v54
    %699 = vmatprep.subr.mxu0 0.0
    %700 = vmatpush1.msra.mxu0 0.0
    %701 = vmatprep.subr.mxu0 0.0
    %702 = vmatpush1.msra.mxu0 0.0
    %703 = vmatprep.subr.mxu0 0.0
    %704 = vmatpush1.msra.mxu0 0.0
    %705 = vmatprep.subr.mxu0 0.0
    %706 = vmatpush1.msra.mxu0 0.0
    %707 = vmatprep.subr.mxu0 0.0
    %708 = vmatpush1.msra.mxu0 0.0
    %709 = vmatprep.subr.mxu0 0.0
    %710 = vmatpush1.msra.mxu0 0.0
    %711 = vmatprep.subr.mxu0 0.0
    %712 = vmatpush1.msra.mxu0 0.0
    %713 = vmatprep.subr.mxu0 0.0
    %714 = vmatpush1.msra.mxu0 0.0
    %715 = vmatprep.subr.mxu0 0.0
    %716 = vmatpush1.msra.mxu0 0.0
    %717 = vmatprep.subr.mxu0 0.0
    %718 = vmatpush1.msra.mxu0 0.0
    %719 = vmatprep.subr.mxu0 0.0
    %720 = vmatpush1.msra.mxu0 0.0
    %721 = vmatprep.subr.mxu0 0.0
    %722 = vmatpush1.msra.mxu0 0.0
    %723 = vmatprep.subr.mxu0 0.0
    %724 = vmatpush1.msra.mxu0 0.0
    %725 = vmatprep.subr.mxu0 0.0
    %726 = vmatpush1.msra.mxu0 0.0
    %727 = vmatprep.subr.mxu0 0.0
    %728 = vmatpush1.msra.mxu0 0.0
    %729 = vmatprep.subr.mxu0 0.0
    %730 = vmatpush1.msra.mxu0 0.0
    %731 = vmatprep.subr.mxu0 0.0
    %732 = vmatpush1.msra.mxu0 0.0
    %733 = vmatprep.subr.mxu0 0.0
    %734 = vmatpush1.msra.mxu0 0.0
    %735 = vmatprep.subr.mxu0 0.0
    %736 = vmatpush1.msra.mxu0 0.0
    %737 = vmatprep.subr.mxu0 0.0
    %738 = vmatpush1.msra.mxu0 0.0
    %739 = vmatprep.subr.mxu0 0.0
    %740 = vmatpush1.msra.mxu0 0.0
    %741 = vmatprep.subr.mxu0 0.0
    %742 = vmatpush1.msra.mxu0 0.0
    %743 = vmatprep.subr.mxu0 0.0
    %744 = vmatpush1.msra.mxu0 0.0
    %745 = vmatprep.subr.mxu0 0.0
    %746 = vmatpush1.msra.mxu0 0.0
    %747 = vmatprep.subr.mxu0 0.0
    %748 = vmatpush1.msra.mxu0 0.0
    %749 = vmatprep.subr.mxu0 0.0
    %750 = vmatpush1.msra.mxu0 0.0
    %751 = vmatprep.subr.mxu0 0.0
    %752 = vmatpush1.msra.mxu0 0.0
    %753 = vmatprep.subr.mxu0 0.0
    %754 = vmatpush1.msra.mxu0 0.0
    %755 = vmatprep.subr.mxu0 0.0
    %756 = vmatpush1.msra.mxu0 0.0
    %757 = vmatprep.subr.mxu0 0.0
    %758 = vmatpush1.msra.mxu0 0.0
    %759 = vmatprep.mubr.f32.mxu0 0.0
    %760 = vmatmul.mubr.f32.gmra.mrb[0].mxu0 %v693
    %v761 = vpop.f32.mrb[0].mxu0
    %v762 = vadd.f32 %v689, %v761
    %v763 = vpop.f32.mrb[0].mxu0
    %764 = vdwg.mxu0
    %v765 = vmax.f32 %v762, 0.0
    %v767 = vlaneseq
    %v768 = vshrl.u32 %v767, 7
    %v769 = vsub.s32 0, %v768
    %v770 = vrot.slane %v60, %v769
    %v773 = vsel %vm324, %v765, 0
    %775 = vmatprep.subr.mxu0 0.0
    %776 = vmatpush1.msra.mxu0 %v56
    %777 = vmatprep.subr.mxu0 0.0
    %778 = vmatpush1.msra.mxu0 %v57
    %779 = vmatprep.subr.mxu0 0.0
    %780 = vmatpush1.msra.mxu0 %v58
    %781 = vmatprep.subr.mxu0 0.0
    %782 = vmatpush1.msra.mxu0 %v59
    %783 = vmatprep.subr.mxu0 0.0
    %784 = vmatpush1.msra.mxu0 0.0
    %785 = vmatprep.subr.mxu0 0.0
    %786 = vmatpush1.msra.mxu0 0.0
    %787 = vmatprep.subr.mxu0 0.0
    %788 = vmatpush1.msra.mxu0 0.0
    %789 = vmatprep.subr.mxu0 0.0
    %790 = vmatpush1.msra.mxu0 0.0
    %791 = vmatprep.subr.mxu0 0.0
    %792 = vmatpush1.msra.mxu0 0.0
    %793 = vmatprep.subr.mxu0 0.0
    %794 = vmatpush1.msra.mxu0 0.0
    %795 = vmatprep.subr.mxu0 0.0
    %796 = vmatpush1.msra.mxu0 0.0
    %797 = vmatprep.subr.mxu0 0.0
    %798 = vmatpush1.msra.mxu0 0.0
    %799 = vmatprep.subr.mxu0 0.0
    %800 = vmatpush1.msra.mxu0 0.0
    %801 = vmatprep.subr.mxu0 0.0
    %802 = vmatpush1.msra.mxu0 0.0
    %803 = vmatprep.subr.mxu0 0.0
    %804 = vmatpush1.msra.mxu0 0.0
    %805 = vmatprep.subr.mxu0 0.0
    %806 = vmatpush1.msra.mxu0 0.0
    %807 = vmatprep.subr.mxu0 0.0
    %808 = vmatpush1.msra.mxu0 0.0
    %809 = vmatprep.subr.mxu0 0.0
    %810 = vmatpush1.msra.mxu0 0.0
    %811 = vmatprep.subr.mxu0 0.0
    %812 = vmatpush1.msra.mxu0 0.0
    %813 = vmatprep.subr.mxu0 0.0
    %814 = vmatpush1.msra.mxu0 0.0
    %815 = vmatprep.subr.mxu0 0.0
    %816 = vmatpush1.msra.mxu0 0.0
    %817 = vmatprep.subr.mxu0 0.0
    %818 = vmatpush1.msra.mxu0 0.0
    %819 = vmatprep.subr.mxu0 0.0
    %820 = vmatpush1.msra.mxu0 0.0
    %821 = vmatprep.subr.mxu0 0.0
    %822 = vmatpush1.msra.mxu0 0.0
    %823 = vmatprep.subr.mxu0 0.0
    %824 = vmatpush1.msra.mxu0 0.0
    %825 = vmatprep.subr.mxu0 0.0
    %826 = vmatpush1.msra.mxu0 0.0
    %827 = vmatprep.subr.mxu0 0.0
    %828 = vmatpush1.msra.mxu0 0.0
    %829 = vmatprep.subr.mxu0 0.0
    %830 = vmatpush1.msra.mxu0 0.0
    %831 = vmatprep.subr.mxu0 0.0
    %832 = vmatpush1.msra.mxu0 0.0
    %833 = vmatprep.subr.mxu0 0.0
    %834 = vmatpush1.msra.mxu0 0.0
    %835 = vmatprep.subr.mxu0 0.0
    %836 = vmatpush1.msra.mxu0 0.0
    %837 = vmatprep.subr.mxu0 0.0
    %838 = vmatpush1.msra.mxu0 0.0
    %839 = vmatprep.mubr.f32.mxu0 0.0
    %840 = vmatmul.mubr.f32.gmra.mrb[0].mxu0 %v773
    %v841 = vpop.f32.mrb[0].mxu0
    %v842 = vadd.f32 %v770, %v841
    %v843 = vpop.f32.mrb[0].mxu0
    %844 = vdwg.mxu0
    %v845 = vld [vmem:[#allocation2] sm:$0x3f]
    %v847 = vsel %vm324, %v842, 0
    %849 = vmatprep.subr.mxu0 0.0
    %850 = vmatpush1.msra.mxu0 %v61
    %851 = vmatprep.subr.mxu0 0.0
    %852 = vmatpush1.msra.mxu0 %v62
    %853 = vmatprep.subr.mxu0 0.0
    %854 = vmatpush1.msra.mxu0 %v63
    %855 = vmatprep.subr.mxu0 0.0
    %856 = vmatpush1.msra.mxu0 %v64
    %857 = vmatprep.subr.mxu0 0.0
    %858 = vmatpush1.msra.mxu0 0.0
    %859 = vmatprep.subr.mxu0 0.0
    %860 = vmatpush1.msra.mxu0 0.0
    %861 = vmatprep.subr.mxu0 0.0
    %862 = vmatpush1.msra.mxu0 0.0
    %863 = vmatprep.subr.mxu0 0.0
    %864 = vmatpush1.msra.mxu0 0.0
    %865 = vmatprep.subr.mxu0 0.0
    %866 = vmatpush1.msra.mxu0 0.0
    %867 = vmatprep.subr.mxu0 0.0
    %868 = vmatpush1.msra.mxu0 0.0
    %869 = vmatprep.subr.mxu0 0.0
    %870 = vmatpush1.msra.mxu0 0.0
    %871 = vmatprep.subr.mxu0 0.0
    %872 = vmatpush1.msra.mxu0 0.0
    %873 = vmatprep.subr.mxu0 0.0
    %874 = vmatpush1.msra.mxu0 0.0
    %875 = vmatprep.subr.mxu0 0.0
    %876 = vmatpush1.msra.mxu0 0.0
    %877 = vmatprep.subr.mxu0 0.0
    %878 = vmatpush1.msra.mxu0 0.0
    %879 = vmatprep.subr.mxu0 0.0
    %880 = vmatpush1.msra.mxu0 0.0
    %881 = vmatprep.subr.mxu0 0.0
    %882 = vmatpush1.msra.mxu0 0.0
    %883 = vmatprep.subr.mxu0 0.0
    %884 = vmatpush1.msra.mxu0 0.0
    %885 = vmatprep.subr.mxu0 0.0
    %886 = vmatpush1.msra.mxu0 0.0
    %887 = vmatprep.subr.mxu0 0.0
    %888 = vmatpush1.msra.mxu0 0.0
    %889 = vmatprep.subr.mxu0 0.0
    %890 = vmatpush1.msra.mxu0 0.0
    %891 = vmatprep.subr.mxu0 0.0
    %892 = vmatpush1.msra.mxu0 0.0
    %893 = vmatprep.subr.mxu0 0.0
    %894 = vmatpush1.msra.mxu0 0.0
    %895 = vmatprep.subr.mxu0 0.0
    %896 = vmatpush1.msra.mxu0 0.0
    %897 = vmatprep.subr.mxu0 0.0
    %898 = vmatpush1.msra.mxu0 0.0
    %899 = vmatprep.subr.mxu0 0.0
    %900 = vmatpush1.msra.mxu0 0.0
    %901 = vmatprep.subr.mxu0 0.0
    %902 = vmatpush1.msra.mxu0 0.0
    %903 = vmatprep.subr.mxu0 0.0
    %904 = vmatpush1.msra.mxu0 0.0
    %905 = vmatprep.subr.mxu0 0.0
    %906 = vmatpush1.msra.mxu0 0.0
    %907 = vmatprep.subr.mxu0 0.0
    %908 = vmatpush1.msra.mxu0 0.0
    %909 = vmatprep.subr.mxu0 0.0
    %910 = vmatpush1.msra.mxu0 0.0
    %911 = vmatprep.subr.mxu0 0.0
    %912 = vmatpush1.msra.mxu0 0.0
    %913 = vmatprep.mubr.f32.mxu0 0.0
    %914 = vmatmul.mubr.f32.gmra.mrb[0].mxu0 %v847
    %v915 = vpop.f32.mrb[0].mxu0
    %v916 = vadd.f32 0.0, %v915
    %v917 = vpop.f32.mrb[0].mxu0
    %918 = vdwg.mxu0
    %v919 = vadd.f32 %v845, %v916
    %v920 = vxor.u32 %v919, 2147483648
    %v921 = vmul.f32 %v920, 1.442695
    %v922 = vpow.pop %v921
    %v923 = vadd.f32 %v922, 1.0
    %v924 = vrcp.pop %v923
    %v925 = vmul.f32 1.0, %v924
    %v926 = vtanh.pop %v919
    %v927 = vmul.f32 %v925, 0.0
    %929 = vrot.lane.b32.xlu0 %v926, 64
    %v930 = vpop.permute.xlu0 %929
    %v932 = vmul.f32 %v925, %v930
    %934 = vrot.lane.b32.xlu0 %v932, 32
    %v935 = vpop.permute.xlu0 %934
    %v937 = vadd.f32 %v927, %v935
    %v938 = vtanh.pop %v937
    %940 = vrot.lane.b32.xlu0 %v938, 64
    %v941 = vpop.permute.xlu0 %940
    %v943 = vmul.f32 %v925, %v941
    %s944 = scalar_lea.vmem [#allocation2], 8
    %v945 = vld [vmem:[%s944] sm:$0x3f]
    %947 = vrot.lane.b32.xlu0 %v943, 32
    %v948 = vpop.permute.xlu0 %947
    %v949 = vsel %vm324, %v948, 0
    %951 = vmatprep.subr.mxu0 0.0
    %952 = vmatpush1.msra.mxu0 %v61
    %953 = vmatprep.subr.mxu0 0.0
    %954 = vmatpush1.msra.mxu0 %v62
    %955 = vmatprep.subr.mxu0 0.0
    %956 = vmatpush1.msra.mxu0 %v63
    %957 = vmatprep.subr.mxu0 0.0
    %958 = vmatpush1.msra.mxu0 %v64
    %959 = vmatprep.subr.mxu0 0.0
    %960 = vmatpush1.msra.mxu0 0.0
    %961 = vmatprep.subr.mxu0 0.0
    %962 = vmatpush1.msra.mxu0 0.0
    %963 = vmatprep.subr.mxu0 0.0
    %964 = vmatpush1.msra.mxu0 0.0
    %965 = vmatprep.subr.mxu0 0.0
    %966 = vmatpush1.msra.mxu0 0.0
    %967 = vmatprep.subr.mxu0 0.0
    %968 = vmatpush1.msra.mxu0 0.0
    %969 = vmatprep.subr.mxu0 0.0
    %970 = vmatpush1.msra.mxu0 0.0
    %971 = vmatprep.subr.mxu0 0.0
    %972 = vmatpush1.msra.mxu0 0.0
    %973 = vmatprep.subr.mxu0 0.0
    %974 = vmatpush1.msra.mxu0 0.0
    %975 = vmatprep.subr.mxu0 0.0
    %976 = vmatpush1.msra.mxu0 0.0
    %977 = vmatprep.subr.mxu0 0.0
    %978 = vmatpush1.msra.mxu0 0.0
    %979 = vmatprep.subr.mxu0 0.0
    %980 = vmatpush1.msra.mxu0 0.0
    %981 = vmatprep.subr.mxu0 0.0
    %982 = vmatpush1.msra.mxu0 0.0
    %983 = vmatprep.subr.mxu0 0.0
    %984 = vmatpush1.msra.mxu0 0.0
    %985 = vmatprep.subr.mxu0 0.0
    %986 = vmatpush1.msra.mxu0 0.0
    %987 = vmatprep.subr.mxu0 0.0
    %988 = vmatpush1.msra.mxu0 0.0
    %989 = vmatprep.subr.mxu0 0.0
    %990 = vmatpush1.msra.mxu0 0.0
    %991 = vmatprep.subr.mxu0 0.0
    %992 = vmatpush1.msra.mxu0 0.0
    %993 = vmatprep.subr.mxu0 0.0
    %994 = vmatpush1.msra.mxu0 0.0
    %995 = vmatprep.subr.mxu0 0.0
    %996 = vmatpush1.msra.mxu0 0.0
    %997 = vmatprep.subr.mxu0 0.0
    %998 = vmatpush1.msra.mxu0 0.0
    %999 = vmatprep.subr.mxu0 0.0
    %1000 = vmatpush1.msra.mxu0 0.0
    %1001 = vmatprep.subr.mxu0 0.0
    %1002 = vmatpush1.msra.mxu0 0.0
    %1003 = vmatprep.subr.mxu0 0.0
    %1004 = vmatpush1.msra.mxu0 0.0
    %1005 = vmatprep.subr.mxu0 0.0
    %1006 = vmatpush1.msra.mxu0 0.0
    %1007 = vmatprep.subr.mxu0 0.0
    %1008 = vmatpush1.msra.mxu0 0.0
    %1009 = vmatprep.subr.mxu0 0.0
    %1010 = vmatpush1.msra.mxu0 0.0
    %1011 = vmatprep.subr.mxu0 0.0
    %1012 = vmatpush1.msra.mxu0 0.0
    %1013 = vmatprep.subr.mxu0 0.0
    %1014 = vmatpush1.msra.mxu0 0.0
    %1015 = vmatprep.mubr.f32.mxu0 0.0
    %1016 = vmatmul.mubr.f32.gmra.mrb[0].mxu0 %v949
    %v1017 = vpop.f32.mrb[0].mxu0
    %v1018 = vadd.f32 0.0, %v1017
    %v1019 = vpop.f32.mrb[0].mxu0
    %1020 = vdwg.mxu0
    %v1021 = vadd.f32 %v945, %v1018
    %v1022 = vxor.u32 %v1021, 2147483648
    %v1023 = vmul.f32 %v1022, 1.442695
    %v1024 = vpow.pop %v1023
    %v1025 = vadd.f32 %v1024, 1.0
    %v1026 = vrcp.pop %v1025
    %v1027 = vmul.f32 1.0, %v1026
    %v1028 = vtanh.pop %v1021
    %v1029 = vmul.f32 %v1027, %v937
    %1031 = vrot.lane.b32.xlu0 %v1028, 64
    %v1032 = vpop.permute.xlu0 %1031
    %v1034 = vmul.f32 %v1027, %v1032
    %1036 = vrot.lane.b32.xlu0 %v1034, 32
    %v1037 = vpop.permute.xlu0 %1036
    %v1039 = vadd.f32 %v1029, %v1037
    %v1040 = vtanh.pop %v1039
    %1042 = vrot.lane.b32.xlu0 %v1040, 64
    %v1043 = vpop.permute.xlu0 %1042
    %v1045 = vmul.f32 %v1027, %v1043
    %s1046 = scalar_lea.vmem [#allocation2], 16
    %v1047 = vld [vmem:[%s1046] sm:$0x3f]
    %1049 = vrot.lane.b32.xlu0 %v1045, 32
    %v1050 = vpop.permute.xlu0 %1049
    %v1051 = vsel %vm324, %v1050, 0
    %1053 = vmatprep.subr.mxu0 0.0
    %1054 = vmatpush1.msra.mxu0 %v61
    %1055 = vmatprep.subr.mxu0 0.0
    %1056 = vmatpush1.msra.mxu0 %v62
    %1057 = vmatprep.subr.mxu0 0.0
    %1058 = vmatpush1.msra.mxu0 %v63
    %1059 = vmatprep.subr.mxu0 0.0
    %1060 = vmatpush1.msra.mxu0 %v64
    %1061 = vmatprep.subr.mxu0 0.0
    %1062 = vmatpush1.msra.mxu0 0.0
    %1063 = vmatprep.subr.mxu0 0.0
    %1064 = vmatpush1.msra.mxu0 0.0
    %1065 = vmatprep.subr.mxu0 0.0
    %1066 = vmatpush1.msra.mxu0 0.0
    %1067 = vmatprep.subr.mxu0 0.0
    %1068 = vmatpush1.msra.mxu0 0.0
    %1069 = vmatprep.subr.mxu0 0.0
    %1070 = vmatpush1.msra.mxu0 0.0
    %1071 = vmatprep.subr.mxu0 0.0
    %1072 = vmatpush1.msra.mxu0 0.0
    %1073 = vmatprep.subr.mxu0 0.0
    %1074 = vmatpush1.msra.mxu0 0.0
    %1075 = vmatprep.subr.mxu0 0.0
    %1076 = vmatpush1.msra.mxu0 0.0
    %1077 = vmatprep.subr.mxu0 0.0
    %1078 = vmatpush1.msra.mxu0 0.0
    %1079 = vmatprep.subr.mxu0 0.0
    %1080 = vmatpush1.msra.mxu0 0.0
    %1081 = vmatprep.subr.mxu0 0.0
    %1082 = vmatpush1.msra.mxu0 0.0
    %1083 = vmatprep.subr.mxu0 0.0
    %1084 = vmatpush1.msra.mxu0 0.0
    %1085 = vmatprep.subr.mxu0 0.0
    %1086 = vmatpush1.msra.mxu0 0.0
    %1087 = vmatprep.subr.mxu0 0.0
    %1088 = vmatpush1.msra.mxu0 0.0
    %1089 = vmatprep.subr.mxu0 0.0
    %1090 = vmatpush1.msra.mxu0 0.0
    %1091 = vmatprep.subr.mxu0 0.0
    %1092 = vmatpush1.msra.mxu0 0.0
    %1093 = vmatprep.subr.mxu0 0.0
    %1094 = vmatpush1.msra.mxu0 0.0
    %1095 = vmatprep.subr.mxu0 0.0
    %1096 = vmatpush1.msra.mxu0 0.0
    %1097 = vmatprep.subr.mxu0 0.0
    %1098 = vmatpush1.msra.mxu0 0.0
    %1099 = vmatprep.subr.mxu0 0.0
    %1100 = vmatpush1.msra.mxu0 0.0
    %1101 = vmatprep.subr.mxu0 0.0
    %1102 = vmatpush1.msra.mxu0 0.0
    %1103 = vmatprep.subr.mxu0 0.0
    %1104 = vmatpush1.msra.mxu0 0.0
    %1105 = vmatprep.subr.mxu0 0.0
    %1106 = vmatpush1.msra.mxu0 0.0
    %1107 = vmatprep.subr.mxu0 0.0
    %1108 = vmatpush1.msra.mxu0 0.0
    %1109 = vmatprep.subr.mxu0 0.0
    %1110 = vmatpush1.msra.mxu0 0.0
    %1111 = vmatprep.subr.mxu0 0.0
    %1112 = vmatpush1.msra.mxu0 0.0
    %1113 = vmatprep.subr.mxu0 0.0
    %1114 = vmatpush1.msra.mxu0 0.0
    %1115 = vmatprep.subr.mxu0 0.0
    %1116 = vmatpush1.msra.mxu0 0.0
    %1117 = vmatprep.mubr.f32.mxu0 0.0
    %1118 = vmatmul.mubr.f32.gmra.mrb[0].mxu0 %v1051
    %v1119 = vpop.f32.mrb[0].mxu0
    %v1120 = vadd.f32 0.0, %v1119
    %v1121 = vpop.f32.mrb[0].mxu0
    %1122 = vdwg.mxu0
    %v1123 = vadd.f32 %v1047, %v1120
    %v1124 = vxor.u32 %v1123, 2147483648
    %v1125 = vmul.f32 %v1124, 1.442695
    %v1126 = vpow.pop %v1125
    %v1127 = vadd.f32 %v1126, 1.0
    %v1128 = vrcp.pop %v1127
    %v1129 = vmul.f32 1.0, %v1128
    %v1130 = vtanh.pop %v1123
    %v1131 = vmul.f32 %v1129, %v1039
    %1133 = vrot.lane.b32.xlu0 %v1130, 64
    %v1134 = vpop.permute.xlu0 %1133
    %v1136 = vmul.f32 %v1129, %v1134
    %1138 = vrot.lane.b32.xlu0 %v1136, 32
    %v1139 = vpop.permute.xlu0 %1138
    %v1141 = vadd.f32 %v1131, %v1139
    %v1142 = vtanh.pop %v1141
    %1144 = vrot.lane.b32.xlu0 %v1142, 64
    %v1145 = vpop.permute.xlu0 %1144
    %v1147 = vmul.f32 %v1129, %v1145
    %s1148 = scalar_lea.vmem [#allocation2], 24
    %v1149 = vld [vmem:[%s1148] sm:$0x3f]
    %1151 = vrot.lane.b32.xlu0 %v1147, 32
    %v1152 = vpop.permute.xlu0 %1151
    %v1153 = vsel %vm324, %v1152, 0
    %1155 = vmatprep.subr.mxu0 0.0
    %1156 = vmatpush1.msra.mxu0 %v61
    %1157 = vmatprep.subr.mxu0 0.0
    %1158 = vmatpush1.msra.mxu0 %v62
    %1159 = vmatprep.subr.mxu0 0.0
    %1160 = vmatpush1.msra.mxu0 %v63
    %1161 = vmatprep.subr.mxu0 0.0
    %1162 = vmatpush1.msra.mxu0 %v64
    %1163 = vmatprep.subr.mxu0 0.0
    %1164 = vmatpush1.msra.mxu0 0.0
    %1165 = vmatprep.subr.mxu0 0.0
    %1166 = vmatpush1.msra.mxu0 0.0
    %1167 = vmatprep.subr.mxu0 0.0
    %1168 = vmatpush1.msra.mxu0 0.0
    %1169 = vmatprep.subr.mxu0 0.0
    %1170 = vmatpush1.msra.mxu0 0.0
    %1171 = vmatprep.subr.mxu0 0.0
    %1172 = vmatpush1.msra.mxu0 0.0
    %1173 = vmatprep.subr.mxu0 0.0
    %1174 = vmatpush1.msra.mxu0 0.0
    %1175 = vmatprep.subr.mxu0 0.0
    %1176 = vmatpush1.msra.mxu0 0.0
    %1177 = vmatprep.subr.mxu0 0.0
    %1178 = vmatpush1.msra.mxu0 0.0
    %1179 = vmatprep.subr.mxu0 0.0
    %1180 = vmatpush1.msra.mxu0 0.0
    %1181 = vmatprep.subr.mxu0 0.0
    %1182 = vmatpush1.msra.mxu0 0.0
    %1183 = vmatprep.subr.mxu0 0.0
    %1184 = vmatpush1.msra.mxu0 0.0
    %1185 = vmatprep.subr.mxu0 0.0
    %1186 = vmatpush1.msra.mxu0 0.0
    %1187 = vmatprep.subr.mxu0 0.0
    %1188 = vmatpush1.msra.mxu0 0.0
    %1189 = vmatprep.subr.mxu0 0.0
    %1190 = vmatpush1.msra.mxu0 0.0
    %1191 = vmatprep.subr.mxu0 0.0
    %1192 = vmatpush1.msra.mxu0 0.0
    %1193 = vmatprep.subr.mxu0 0.0
    %1194 = vmatpush1.msra.mxu0 0.0
    %1195 = vmatprep.subr.mxu0 0.0
    %1196 = vmatpush1.msra.mxu0 0.0
    %1197 = vmatprep.subr.mxu0 0.0
    %1198 = vmatpush1.msra.mxu0 0.0
    %1199 = vmatprep.subr.mxu0 0.0
    %1200 = vmatpush1.msra.mxu0 0.0
    %1201 = vmatprep.subr.mxu0 0.0
    %1202 = vmatpush1.msra.mxu0 0.0
    %1203 = vmatprep.subr.mxu0 0.0
    %1204 = vmatpush1.msra.mxu0 0.0
    %1205 = vmatprep.subr.mxu0 0.0
    %1206 = vmatpush1.msra.mxu0 0.0
    %1207 = vmatprep.subr.mxu0 0.0
    %1208 = vmatpush1.msra.mxu0 0.0
    %1209 = vmatprep.subr.mxu0 0.0
    %1210 = vmatpush1.msra.mxu0 0.0
    %1211 = vmatprep.subr.mxu0 0.0
    %1212 = vmatpush1.msra.mxu0 0.0
    %1213 = vmatprep.subr.mxu0 0.0
    %1214 = vmatpush1.msra.mxu0 0.0
    %1215 = vmatprep.subr.mxu0 0.0
    %1216 = vmatpush1.msra.mxu0 0.0
    %1217 = vmatprep.subr.mxu0 0.0
    %1218 = vmatpush1.msra.mxu0 0.0
    %1219 = vmatprep.mubr.f32.mxu0 0.0
    %1220 = vmatmul.mubr.f32.gmra.mrb[0].mxu0 %v1153
    %v1221 = vpop.f32.mrb[0].mxu0
    %v1222 = vadd.f32 0.0, %v1221
    %v1223 = vpop.f32.mrb[0].mxu0
    %1224 = vdwg.mxu0
    %v1225 = vadd.f32 %v1149, %v1222
    %v1226 = vxor.u32 %v1225, 2147483648
    %v1227 = vmul.f32 %v1226, 1.442695
    %v1228 = vpow.pop %v1227
    %v1229 = vadd.f32 %v1228, 1.0
    %v1230 = vrcp.pop %v1229
    %v1231 = vmul.f32 1.0, %v1230
    %v1232 = vtanh.pop %v1225
    %v1233 = vmul.f32 %v1231, %v1141
    %1235 = vrot.lane.b32.xlu0 %v1232, 64
    %v1236 = vpop.permute.xlu0 %1235
    %v1238 = vmul.f32 %v1231, %v1236
    %1240 = vrot.lane.b32.xlu0 %v1238, 32
    %v1241 = vpop.permute.xlu0 %1240
    %v1243 = vadd.f32 %v1233, %v1241
    %v1244 = vtanh.pop %v1243
    %1246 = vrot.lane.b32.xlu0 %v1244, 64
    %v1247 = vpop.permute.xlu0 %1246
    %v1249 = vmul.f32 %v1231, %v1247
    %s1250 = scalar_lea.vmem [#allocation2], 32
    %v1251 = vld [vmem:[%s1250] sm:$0x3f]
    %1253 = vrot.lane.b32.xlu0 %v1249, 32
    %v1254 = vpop.permute.xlu0 %1253
    %v1255 = vsel %vm324, %v1254, 0
    %1257 = vmatprep.subr.mxu0 0.0
    %1258 = vmatpush1.msra.mxu0 %v61
    %1259 = vmatprep.subr.mxu0 0.0
    %1260 = vmatpush1.msra.mxu0 %v62
    %1261 = vmatprep.subr.mxu0 0.0
    %1262 = vmatpush1.msra.mxu0 %v63
    %1263 = vmatprep.subr.mxu0 0.0
    %1264 = vmatpush1.msra.mxu0 %v64
    %1265 = vmatprep.subr.mxu0 0.0
    %1266 = vmatpush1.msra.mxu0 0.0
    %1267 = vmatprep.subr.mxu0 0.0
    %1268 = vmatpush1.msra.mxu0 0.0
    %1269 = vmatprep.subr.mxu0 0.0
    %1270 = vmatpush1.msra.mxu0 0.0
    %1271 = vmatprep.subr.mxu0 0.0
    %1272 = vmatpush1.msra.mxu0 0.0
    %1273 = vmatprep.subr.mxu0 0.0
    %1274 = vmatpush1.msra.mxu0 0.0
    %1275 = vmatprep.subr.mxu0 0.0
    %1276 = vmatpush1.msra.mxu0 0.0
    %1277 = vmatprep.subr.mxu0 0.0
    %1278 = vmatpush1.msra.mxu0 0.0
    %1279 = vmatprep.subr.mxu0 0.0
    %1280 = vmatpush1.msra.mxu0 0.0
    %1281 = vmatprep.subr.mxu0 0.0
    %1282 = vmatpush1.msra.mxu0 0.0
    %1283 = vmatprep.subr.mxu0 0.0
    %1284 = vmatpush1.msra.mxu0 0.0
    %1285 = vmatprep.subr.mxu0 0.0
    %1286 = vmatpush1.msra.mxu0 0.0
    %1287 = vmatprep.subr.mxu0 0.0
    %1288 = vmatpush1.msra.mxu0 0.0
    %1289 = vmatprep.subr.mxu0 0.0
    %1290 = vmatpush1.msra.mxu0 0.0
    %1291 = vmatprep.subr.mxu0 0.0
    %1292 = vmatpush1.msra.mxu0 0.0
    %1293 = vmatprep.subr.mxu0 0.0
    %1294 = vmatpush1.msra.mxu0 0.0
    %1295 = vmatprep.subr.mxu0 0.0
    %1296 = vmatpush1.msra.mxu0 0.0
    %1297 = vmatprep.subr.mxu0 0.0
    %1298 = vmatpush1.msra.mxu0 0.0
    %1299 = vmatprep.subr.mxu0 0.0
    %1300 = vmatpush1.msra.mxu0 0.0
    %1301 = vmatprep.subr.mxu0 0.0
    %1302 = vmatpush1.msra.mxu0 0.0
    %1303 = vmatprep.subr.mxu0 0.0
    %1304 = vmatpush1.msra.mxu0 0.0
    %1305 = vmatprep.subr.mxu0 0.0
    %1306 = vmatpush1.msra.mxu0 0.0
    %1307 = vmatprep.subr.mxu0 0.0
    %1308 = vmatpush1.msra.mxu0 0.0
    %1309 = vmatprep.subr.mxu0 0.0
    %1310 = vmatpush1.msra.mxu0 0.0
    %1311 = vmatprep.subr.mxu0 0.0
    %1312 = vmatpush1.msra.mxu0 0.0
    %1313 = vmatprep.subr.mxu0 0.0
    %1314 = vmatpush1.msra.mxu0 0.0
    %1315 = vmatprep.subr.mxu0 0.0
    %1316 = vmatpush1.msra.mxu0 0.0
    %1317 = vmatprep.subr.mxu0 0.0
    %1318 = vmatpush1.msra.mxu0 0.0
    %1319 = vmatprep.subr.mxu0 0.0
    %1320 = vmatpush1.msra.mxu0 0.0
    %1321 = vmatprep.mubr.f32.mxu0 0.0
    %1322 = vmatmul.mubr.f32.gmra.mrb[0].mxu0 %v1255
    %v1323 = vpop.f32.mrb[0].mxu0
    %v1324 = vadd.f32 0.0, %v1323
    %v1325 = vpop.f32.mrb[0].mxu0
    %1326 = vdwg.mxu0
    %v1327 = vadd.f32 %v1251, %v1324
    %v1328 = vxor.u32 %v1327, 2147483648
    %v1329 = vmul.f32 %v1328, 1.442695
    %v1330 = vpow.pop %v1329
    %v1331 = vadd.f32 %v1330, 1.0
    %v1332 = vrcp.pop %v1331
    %v1333 = vmul.f32 1.0, %v1332
    %v1334 = vtanh.pop %v1327
    %v1335 = vmul.f32 %v1333, %v1243
    %1337 = vrot.lane.b32.xlu0 %v1334, 64
    %v1338 = vpop.permute.xlu0 %1337
    %v1340 = vmul.f32 %v1333, %v1338
    %1342 = vrot.lane.b32.xlu0 %v1340, 32
    %v1343 = vpop.permute.xlu0 %1342
    %v1345 = vadd.f32 %v1335, %v1343
    %v1346 = vtanh.pop %v1345
    %1348 = vrot.lane.b32.xlu0 %v1346, 64
    %v1349 = vpop.permute.xlu0 %1348
    %v1351 = vmul.f32 %v1333, %v1349
    %s1352 = scalar_lea.vmem [#allocation2], 40
    %v1353 = vld [vmem:[%s1352] sm:$0x3f]
    %1355 = vrot.lane.b32.xlu0 %v1351, 32
    %v1356 = vpop.permute.xlu0 %1355
    %v1357 = vsel %vm324, %v1356, 0
    %1359 = vmatprep.subr.mxu0 0.0
    %1360 = vmatpush1.msra.mxu0 %v61
    %1361 = vmatprep.subr.mxu0 0.0
    %1362 = vmatpush1.msra.mxu0 %v62
    %1363 = vmatprep.subr.mxu0 0.0
    %1364 = vmatpush1.msra.mxu0 %v63
    %1365 = vmatprep.subr.mxu0 0.0
    %1366 = vmatpush1.msra.mxu0 %v64
    %1367 = vmatprep.subr.mxu0 0.0
    %1368 = vmatpush1.msra.mxu0 0.0
    %1369 = vmatprep.subr.mxu0 0.0
    %1370 = vmatpush1.msra.mxu0 0.0
    %1371 = vmatprep.subr.mxu0 0.0
    %1372 = vmatpush1.msra.mxu0 0.0
    %1373 = vmatprep.subr.mxu0 0.0
    %1374 = vmatpush1.msra.mxu0 0.0
    %1375 = vmatprep.subr.mxu0 0.0
    %1376 = vmatpush1.msra.mxu0 0.0
    %1377 = vmatprep.subr.mxu0 0.0
    %1378 = vmatpush1.msra.mxu0 0.0
    %1379 = vmatprep.subr.mxu0 0.0
    %1380 = vmatpush1.msra.mxu0 0.0
    %1381 = vmatprep.subr.mxu0 0.0
    %1382 = vmatpush1.msra.mxu0 0.0
    %1383 = vmatprep.subr.mxu0 0.0
    %1384 = vmatpush1.msra.mxu0 0.0
    %1385 = vmatprep.subr.mxu0 0.0
    %1386 = vmatpush1.msra.mxu0 0.0
    %1387 = vmatprep.subr.mxu0 0.0
    %1388 = vmatpush1.msra.mxu0 0.0
    %1389 = vmatprep.subr.mxu0 0.0
    %1390 = vmatpush1.msra.mxu0 0.0
    %1391 = vmatprep.subr.mxu0 0.0
    %1392 = vmatpush1.msra.mxu0 0.0
    %1393 = vmatprep.subr.mxu0 0.0
    %1394 = vmatpush1.msra.mxu0 0.0
    %1395 = vmatprep.subr.mxu0 0.0
    %1396 = vmatpush1.msra.mxu0 0.0
    %1397 = vmatprep.subr.mxu0 0.0
    %1398 = vmatpush1.msra.mxu0 0.0
    %1399 = vmatprep.subr.mxu0 0.0
    %1400 = vmatpush1.msra.mxu0 0.0
    %1401 = vmatprep.subr.mxu0 0.0
    %1402 = vmatpush1.msra.mxu0 0.0
    %1403 = vmatprep.subr.mxu0 0.0
    %1404 = vmatpush1.msra.mxu0 0.0
    %1405 = vmatprep.subr.mxu0 0.0
    %1406 = vmatpush1.msra.mxu0 0.0
    %1407 = vmatprep.subr.mxu0 0.0
    %1408 = vmatpush1.msra.mxu0 0.0
    %1409 = vmatprep.subr.mxu0 0.0
    %1410 = vmatpush1.msra.mxu0 0.0
    %1411 = vmatprep.subr.mxu0 0.0
    %1412 = vmatpush1.msra.mxu0 0.0
    %1413 = vmatprep.subr.mxu0 0.0
    %1414 = vmatpush1.msra.mxu0 0.0
    %1415 = vmatprep.subr.mxu0 0.0
    %1416 = vmatpush1.msra.mxu0 0.0
    %1417 = vmatprep.subr.mxu0 0.0
    %1418 = vmatpush1.msra.mxu0 0.0
    %1419 = vmatprep.subr.mxu0 0.0
    %1420 = vmatpush1.msra.mxu0 0.0
    %1421 = vmatprep.subr.mxu0 0.0
    %1422 = vmatpush1.msra.mxu0 0.0
    %1423 = vmatprep.mubr.f32.mxu0 0.0
    %1424 = vmatmul.mubr.f32.gmra.mrb[0].mxu0 %v1357
    %v1425 = vpop.f32.mrb[0].mxu0
    %v1426 = vadd.f32 0.0, %v1425
    %v1427 = vpop.f32.mrb[0].mxu0
    %1428 = vdwg.mxu0
    %v1429 = vadd.f32 %v1353, %v1426
    %v1430 = vxor.u32 %v1429, 2147483648
    %v1431 = vmul.f32 %v1430, 1.442695
    %v1432 = vpow.pop %v1431
    %v1433 = vadd.f32 %v1432, 1.0
    %v1434 = vrcp.pop %v1433
    %v1435 = vmul.f32 1.0, %v1434
    %v1436 = vtanh.pop %v1429
    %v1437 = vmul.f32 %v1435, %v1345
    %1439 = vrot.lane.b32.xlu0 %v1436, 64
    %v1440 = vpop.permute.xlu0 %1439
    %v1442 = vmul.f32 %v1435, %v1440
    %1444 = vrot.lane.b32.xlu0 %v1442, 32
    %v1445 = vpop.permute.xlu0 %1444
    %v1447 = vadd.f32 %v1437, %v1445
    %v1448 = vtanh.pop %v1447
    %1450 = vrot.lane.b32.xlu0 %v1448, 64
    %v1451 = vpop.permute.xlu0 %1450
    %v1453 = vmul.f32 %v1435, %v1451
    %s1454 = scalar_lea.vmem [#allocation2], 48
    %v1455 = vld [vmem:[%s1454] sm:$0x3f]
    %1457 = vrot.lane.b32.xlu0 %v1453, 32
    %v1458 = vpop.permute.xlu0 %1457
    %v1459 = vsel %vm324, %v1458, 0
    %1461 = vmatprep.subr.mxu0 0.0
    %1462 = vmatpush1.msra.mxu0 %v61
    %1463 = vmatprep.subr.mxu0 0.0
    %1464 = vmatpush1.msra.mxu0 %v62
    %1465 = vmatprep.subr.mxu0 0.0
    %1466 = vmatpush1.msra.mxu0 %v63
    %1467 = vmatprep.subr.mxu0 0.0
    %1468 = vmatpush1.msra.mxu0 %v64
    %1469 = vmatprep.subr.mxu0 0.0
    %1470 = vmatpush1.msra.mxu0 0.0
    %1471 = vmatprep.subr.mxu0 0.0
    %1472 = vmatpush1.msra.mxu0 0.0
    %1473 = vmatprep.subr.mxu0 0.0
    %1474 = vmatpush1.msra.mxu0 0.0
    %1475 = vmatprep.subr.mxu0 0.0
    %1476 = vmatpush1.msra.mxu0 0.0
    %1477 = vmatprep.subr.mxu0 0.0
    %1478 = vmatpush1.msra.mxu0 0.0
    %1479 = vmatprep.subr.mxu0 0.0
    %1480 = vmatpush1.msra.mxu0 0.0
    %1481 = vmatprep.subr.mxu0 0.0
    %1482 = vmatpush1.msra.mxu0 0.0
    %1483 = vmatprep.subr.mxu0 0.0
    %1484 = vmatpush1.msra.mxu0 0.0
    %1485 = vmatprep.subr.mxu0 0.0
    %1486 = vmatpush1.msra.mxu0 0.0
    %1487 = vmatprep.subr.mxu0 0.0
    %1488 = vmatpush1.msra.mxu0 0.0
    %1489 = vmatprep.subr.mxu0 0.0
    %1490 = vmatpush1.msra.mxu0 0.0
    %1491 = vmatprep.subr.mxu0 0.0
    %1492 = vmatpush1.msra.mxu0 0.0
    %1493 = vmatprep.subr.mxu0 0.0
    %1494 = vmatpush1.msra.mxu0 0.0
    %1495 = vmatprep.subr.mxu0 0.0
    %1496 = vmatpush1.msra.mxu0 0.0
    %1497 = vmatprep.subr.mxu0 0.0
    %1498 = vmatpush1.msra.mxu0 0.0
    %1499 = vmatprep.subr.mxu0 0.0
    %1500 = vmatpush1.msra.mxu0 0.0
    %1501 = vmatprep.subr.mxu0 0.0
    %1502 = vmatpush1.msra.mxu0 0.0
    %1503 = vmatprep.subr.mxu0 0.0
    %1504 = vmatpush1.msra.mxu0 0.0
    %1505 = vmatprep.subr.mxu0 0.0
    %1506 = vmatpush1.msra.mxu0 0.0
    %1507 = vmatprep.subr.mxu0 0.0
    %1508 = vmatpush1.msra.mxu0 0.0
    %1509 = vmatprep.subr.mxu0 0.0
    %1510 = vmatpush1.msra.mxu0 0.0
    %1511 = vmatprep.subr.mxu0 0.0
    %1512 = vmatpush1.msra.mxu0 0.0
    %1513 = vmatprep.subr.mxu0 0.0
    %1514 = vmatpush1.msra.mxu0 0.0
    %1515 = vmatprep.subr.mxu0 0.0
    %1516 = vmatpush1.msra.mxu0 0.0
    %1517 = vmatprep.subr.mxu0 0.0
    %1518 = vmatpush1.msra.mxu0 0.0
    %1519 = vmatprep.subr.mxu0 0.0
    %1520 = vmatpush1.msra.mxu0 0.0
    %1521 = vmatprep.subr.mxu0 0.0
    %1522 = vmatpush1.msra.mxu0 0.0
    %1523 = vmatprep.subr.mxu0 0.0
    %1524 = vmatpush1.msra.mxu0 0.0
    %1525 = vmatprep.mubr.f32.mxu0 0.0
    %1526 = vmatmul.mubr.f32.gmra.mrb[0].mxu0 %v1459
    %v1527 = vpop.f32.mrb[0].mxu0
    %v1528 = vadd.f32 0.0, %v1527
    %v1529 = vpop.f32.mrb[0].mxu0
    %1530 = vdwg.mxu0
    %v1531 = vadd.f32 %v1455, %v1528
    %v1532 = vxor.u32 %v1531, 2147483648
    %v1533 = vmul.f32 %v1532, 1.442695
    %v1534 = vpow.pop %v1533
    %v1535 = vadd.f32 %v1534, 1.0
    %v1536 = vrcp.pop %v1535
    %v1537 = vmul.f32 1.0, %v1536
    %v1538 = vtanh.pop %v1531
    %v1539 = vmul.f32 %v1537, %v1447
    %1541 = vrot.lane.b32.xlu0 %v1538, 64
    %v1542 = vpop.permute.xlu0 %1541
    %v1544 = vmul.f32 %v1537, %v1542
    %1546 = vrot.lane.b32.xlu0 %v1544, 32
    %v1547 = vpop.permute.xlu0 %1546
    %v1549 = vadd.f32 %v1539, %v1547
    %v1550 = vtanh.pop %v1549
    %1552 = vrot.lane.b32.xlu0 %v1550, 64
    %v1553 = vpop.permute.xlu0 %1552
    %v1555 = vmul.f32 %v1537, %v1553
    %s1556 = scalar_lea.vmem [#allocation2], 56
    %v1557 = vld [vmem:[%s1556] sm:$0x3f]
    %1559 = vrot.lane.b32.xlu0 %v1555, 32
    %v1560 = vpop.permute.xlu0 %1559
    %v1561 = vsel %vm324, %v1560, 0
    %1563 = vmatprep.subr.mxu0 0.0
    %1564 = vmatpush1.msra.mxu0 %v61
    %1565 = vmatprep.subr.mxu0 0.0
    %1566 = vmatpush1.msra.mxu0 %v62
    %1567 = vmatprep.subr.mxu0 0.0
    %1568 = vmatpush1.msra.mxu0 %v63
    %1569 = vmatprep.subr.mxu0 0.0
    %1570 = vmatpush1.msra.mxu0 %v64
    %1571 = vmatprep.subr.mxu0 0.0
    %1572 = vmatpush1.msra.mxu0 0.0
    %1573 = vmatprep.subr.mxu0 0.0
    %1574 = vmatpush1.msra.mxu0 0.0
    %1575 = vmatprep.subr.mxu0 0.0
    %1576 = vmatpush1.msra.mxu0 0.0
    %1577 = vmatprep.subr.mxu0 0.0
    %1578 = vmatpush1.msra.mxu0 0.0
    %1579 = vmatprep.subr.mxu0 0.0
    %1580 = vmatpush1.msra.mxu0 0.0
    %1581 = vmatprep.subr.mxu0 0.0
    %1582 = vmatpush1.msra.mxu0 0.0
    %1583 = vmatprep.subr.mxu0 0.0
    %1584 = vmatpush1.msra.mxu0 0.0
    %1585 = vmatprep.subr.mxu0 0.0
    %1586 = vmatpush1.msra.mxu0 0.0
    %1587 = vmatprep.subr.mxu0 0.0
    %1588 = vmatpush1.msra.mxu0 0.0
    %1589 = vmatprep.subr.mxu0 0.0
    %1590 = vmatpush1.msra.mxu0 0.0
    %1591 = vmatprep.subr.mxu0 0.0
    %1592 = vmatpush1.msra.mxu0 0.0
    %1593 = vmatprep.subr.mxu0 0.0
    %1594 = vmatpush1.msra.mxu0 0.0
    %1595 = vmatprep.subr.mxu0 0.0
    %1596 = vmatpush1.msra.mxu0 0.0
    %1597 = vmatprep.subr.mxu0 0.0
    %1598 = vmatpush1.msra.mxu0 0.0
    %1599 = vmatprep.subr.mxu0 0.0
    %1600 = vmatpush1.msra.mxu0 0.0
    %1601 = vmatprep.subr.mxu0 0.0
    %1602 = vmatpush1.msra.mxu0 0.0
    %1603 = vmatprep.subr.mxu0 0.0
    %1604 = vmatpush1.msra.mxu0 0.0
    %1605 = vmatprep.subr.mxu0 0.0
    %1606 = vmatpush1.msra.mxu0 0.0
    %1607 = vmatprep.subr.mxu0 0.0
    %1608 = vmatpush1.msra.mxu0 0.0
    %1609 = vmatprep.subr.mxu0 0.0
    %1610 = vmatpush1.msra.mxu0 0.0
    %1611 = vmatprep.subr.mxu0 0.0
    %1612 = vmatpush1.msra.mxu0 0.0
    %1613 = vmatprep.subr.mxu0 0.0
    %1614 = vmatpush1.msra.mxu0 0.0
    %1615 = vmatprep.subr.mxu0 0.0
    %1616 = vmatpush1.msra.mxu0 0.0
    %1617 = vmatprep.subr.mxu0 0.0
    %1618 = vmatpush1.msra.mxu0 0.0
    %1619 = vmatprep.subr.mxu0 0.0
    %1620 = vmatpush1.msra.mxu0 0.0
    %1621 = vmatprep.subr.mxu0 0.0
    %1622 = vmatpush1.msra.mxu0 0.0
    %1623 = vmatprep.subr.mxu0 0.0
    %1624 = vmatpush1.msra.mxu0 0.0
    %1625 = vmatprep.subr.mxu0 0.0
    %1626 = vmatpush1.msra.mxu0 0.0
    %1627 = vmatprep.mubr.f32.mxu0 0.0
    %1628 = vmatmul.mubr.f32.gmra.mrb[0].mxu0 %v1561
    %v1629 = vpop.f32.mrb[0].mxu0
    %v1630 = vadd.f32 0.0, %v1629
    %v1631 = vpop.f32.mrb[0].mxu0
    %1632 = vdwg.mxu0
    %v1633 = vadd.f32 %v1557, %v1630
    %v1634 = vxor.u32 %v1633, 2147483648
    %v1635 = vmul.f32 %v1634, 1.442695
    %v1636 = vpow.pop %v1635
    %v1637 = vadd.f32 %v1636, 1.0
    %v1638 = vrcp.pop %v1637
    %v1639 = vmul.f32 1.0, %v1638
    %v1640 = vtanh.pop %v1633
    %v1641 = vmul.f32 %v1639, %v1549
    %1643 = vrot.lane.b32.xlu0 %v1640, 64
    %v1644 = vpop.permute.xlu0 %1643
    %v1646 = vmul.f32 %v1639, %v1644
    %1648 = vrot.lane.b32.xlu0 %v1646, 32
    %v1649 = vpop.permute.xlu0 %1648
    %v1651 = vadd.f32 %v1641, %v1649
    %v1652 = vtanh.pop %v1651
    %1654 = vrot.lane.b32.xlu0 %v1652, 64
    %v1655 = vpop.permute.xlu0 %1654
    %v1657 = vmul.f32 %v1639, %v1655
    %v1659 = vcombine.high %v1657, %v1657
    %v1661 = vunpack.c.l.s4 1966171168
    %v1662 = vunpack.c.0.s8 %v1661
    %v1663 = vlaneseq
    %v1664 = vshrl.u32 %v1663, 7
    %v1665 = vsub.s32 %v1662, %v1664
    %v1666 = vrot.slane %v1657, %v1665
    %v1668 = vunpack.c.l.s4 1966171168
    %v1669 = vunpack.c.0.s8 %v1668
    %v1670 = vlaneseq
    %v1671 = vshrl.u32 %v1670, 7
    %v1672 = vsub.s32 %v1669, %v1671
    %v1673 = vrot.slane %v1659, %v1672
    %v1674 = vcombine.high %v1666, %v1666
    %v1675 = vcombine.high %v1673, %v1673
    %v1677 = vunpack.c.l.s4 1966171168
    %v1678 = vunpack.c.0.s8 %v1677
    %v1679 = vlaneseq
    %v1680 = vshrl.u32 %v1679, 7
    %v1681 = vsub.s32 %v1678, %v1680
    %v1682 = vrot.slane %v1666, %v1681
    %v1684 = vunpack.c.l.s4 1966171168
    %v1685 = vunpack.c.0.s8 %v1684
    %v1686 = vlaneseq
    %v1687 = vshrl.u32 %v1686, 7
    %v1688 = vsub.s32 %v1685, %v1687
    %v1689 = vrot.slane %v1673, %v1688
    %v1691 = vunpack.c.l.s4 1966171168
    %v1692 = vunpack.c.0.s8 %v1691
    %v1693 = vlaneseq
    %v1694 = vshrl.u32 %v1693, 7
    %v1695 = vsub.s32 %v1692, %v1694
    %v1696 = vrot.slane %v1674, %v1695
    %v1698 = vunpack.c.l.s4 1966171168
    %v1699 = vunpack.c.0.s8 %v1698
    %v1700 = vlaneseq
    %v1701 = vshrl.u32 %v1700, 7
    %v1702 = vsub.s32 %v1699, %v1701
    %v1703 = vrot.slane %v1675, %v1702
    %v1704 = vcombine.high %v1682, %v1682
    %v1705 = vcombine.high %v1696, %v1696
    %v1713 = vlaneseq
    %v1714 = vshrl.u32 %v1713, 7
    %v1715 = vsub.s32 0, %v1714
    %v1716 = vrot.slane %v65, %v1715
    %v1718 = vunpack.c.l.s4 1966171168
    %v1719 = vunpack.c.0.s8 %v1718
    %v1720 = vlaneseq
    %v1721 = vshrl.u32 %v1720, 7
    %v1722 = vsub.s32 %v1719, %v1721
    %v1723 = vrot.slane %v1716, %v1722
    %v1724 = vcombine.high %v1723, %v1723
    %v1726 = vunpack.c.l.s4 1966171168
    %v1727 = vunpack.c.0.s8 %v1726
    %v1728 = vlaneseq
    %v1729 = vshrl.u32 %v1728, 7
    %v1730 = vsub.s32 %v1727, %v1729
    %v1731 = vrot.slane %v1723, %v1730
    %v1733 = vunpack.c.l.s4 1966171168
    %v1734 = vunpack.c.0.s8 %v1733
    %v1735 = vlaneseq
    %v1736 = vshrl.u32 %v1735, 7
    %v1737 = vsub.s32 %v1734, %v1736
    %v1738 = vrot.slane %v1724, %v1737
    %v1739 = vcombine.high %v1731, %v1731
    %1740 = vrot.lane.b32.xlu0 %v1731, 96
    %v1741 = vpop.permute.xlu0 %1740
    %1742 = vrot.lane.b32.xlu0 %v1738, 96
    %v1743 = vpop.permute.xlu0 %1742
    %1744 = vrot.lane.b32.xlu0 %v1739, 96
    %v1745 = vpop.permute.xlu0 %1744
    %v1749 = vmul.f32 %v1682, %v1741
    %v1750 = vmul.f32 %v1696, %v1743
    %v1751 = vmul.f32 %v1704, %v1745
    %v1752 = vmul.f32 %v1705, %v1741
    %v1753 = vmul.f32 %v1689, %v1743
    %v1754 = vmul.f32 %v1703, %v1745
    %v1761 = vcombine.low %v1749, %v1750
    %v1763 = vunpack.c.l.s4 1966171168
    %v1764 = vunpack.c.0.s8 %v1763
    %v1765 = vlaneseq
    %v1766 = vshrl.u32 %v1765, 7
    %v1767 = vsub.s32 %v1764, %v1766
    %v1768 = vrot.slane %v1761, %v1767
    %v1770 = vunpack.c.l.s4 1966171168
    %v1771 = vunpack.c.0.s8 %v1770
    %v1772 = vlaneseq
    %v1773 = vshrl.u32 %v1772, 7
    %v1774 = vsub.s32 %v1771, %v1773
    %v1775 = vrot.slane %v1751, %v1774
    %v1776 = vcombine.low %v1768, %v1775
    %v1778 = vunpack.c.l.s4 1966171168
    %v1779 = vunpack.c.0.s8 %v1778
    %v1780 = vlaneseq
    %v1781 = vshrl.u32 %v1780, 7
    %v1782 = vsub.s32 %v1779, %v1781
    %v1783 = vrot.slane %v1776, %v1782
    %v1784 = vcombine.low %v1752, %v1753
    %v1786 = vunpack.c.l.s4 1966171168
    %v1787 = vunpack.c.0.s8 %v1786
    %v1788 = vlaneseq
    %v1789 = vshrl.u32 %v1788, 7
    %v1790 = vsub.s32 %v1787, %v1789
    %v1791 = vrot.slane %v1784, %v1790
    %v1793 = vunpack.c.l.s4 1966171168
    %v1794 = vunpack.c.0.s8 %v1793
    %v1795 = vlaneseq
    %v1796 = vshrl.u32 %v1795, 7
    %v1797 = vsub.s32 %v1794, %v1796
    %v1798 = vrot.slane %v1754, %v1797
    %v1799 = vcombine.low %v1791, %v1798
    %v1801 = vunpack.c.l.s4 1966171168
    %v1802 = vunpack.c.0.s8 %v1801
    %v1803 = vlaneseq
    %v1804 = vshrl.u32 %v1803, 7
    %v1805 = vsub.s32 %v1802, %v1804
    %v1806 = vrot.slane %v1799, %v1805
    %1807 = vrot.lane.b32.xlu0 %v1783, 32
    %v1808 = vpop.permute.xlu0 %1807
    %1809 = vrot.lane.b32.xlu0 %v1806, 32
    %v1810 = vpop.permute.xlu0 %1809
    %vm1813 = vcmask 256000
    %v1814 = vsel %vm1813, %v1808, 0.0
    %1815 = vadd.xlane.f32.xlu0 %v1814
    %v1816 = vpop.xlane.xlu0 %1815
    %v1817 = vsel %vm1813, %v1810, 0.0
    %1818 = vadd.xlane.f32.xlu0 %v1817
    %v1819 = vpop.xlane.xlu0 %1818
    %v1821 = vlaneseq
    %v1822 = vshrl.u32 %v1821, 7
    %v1823 = vsub.s32 0, %v1822
    %v1824 = vrot.slane %v66, %v1823
    %1825 = vset.pattern.permute.xlu0 0
    %1826 = vperm.xlu0 %1825, %v1824
    %v1827 = vpop.permute.xlu0 %1826
    %v1829 = vadd.f32 %v1816, %v1827
    %v1830 = vadd.f32 %v1819, %v1827
    %v1833 = vlaneseq
    %v1834 = vand.u32 %v1833, 127
    %v1835 = vlaneseq
    %v1836 = vshrl.u32 %v1835, 7
    %v1837 = vsub.s32 %v1834, %v1836
    %v1838 = vrot.slane %v1829, %v1837
    %v1839 = vlaneseq
    %v1840 = vshrl.u32 %v1839, 7
    %v1841 = vsub.s32 %v1834, %v1840
    %v1842 = vrot.slane %v1830, %v1841
    %vm1843 = vcmask 1041409
    %v1844 = vsel %vm1843, %v1842, %v1838
    %vm1846 = vcmask 17408
    %1847 = vst.msk [vmem:[#allocation7] sm:$0x3] %vm1846, %v1844
    // Predicated region
    $region50: #{tpu_custom_call.1} parent=1 // pred_check
      _
    $region51: #{tpu_custom_call.1} parent=1 // pred_check_branch
      %1849 = sbr.rel (0) target = $region53
    $region52: #{tpu_custom_call.1} parent=1 // pred_region
      %s1851 = ssub.s32 32, 32
      %1852 = vsyncadd [#allocation6], %s1851
      %s1854 = sshll.u32 [#allocation7], 4
      %s1855 = int_to_ptr.vmem [resolvable:$true] %s1854
      %1857 = dma.vmem_to_hbm [thread:$0]  %s1855, 32, %s11, [#allocation6]
    $region53: #{tpu_custom_call.1} parent=1 // pred_fallthru
      _
    // Predicated region
    $region54: #{tpu_custom_call.1} parent=1 // pred_check
      _
    $region55: #{tpu_custom_call.1} parent=1 // pred_check_branch
      %1859 = sbr.rel (0) target = $region57
    $region56: #{tpu_custom_call.1} parent=1 // pred_region
      %1860 = dma.done [#allocation6], 32
    $region57: #{tpu_custom_call.1} parent=1 // pred_fallthru
      _
    %1861 = vsyncpa [#allocation5], 1
    %1862 = vsyncpa [#allocation6], 1

</llo_original>
